<compile_context>
chip_gen: v7x
topology: tpu7x:2x2x1
jax: 0.10.0
libtpu: 0.0.40
codegen_flags: <defaults>
</compile_context>

<pallas_src>
import functools

import jax
import jax.numpy as jnp
from jax import lax
from jax.experimental import pallas as pl
from jax.experimental.pallas import tpu as pltpu

NUM_KERNELS = 6
KMAX = 2 * (NUM_KERNELS - 1) + 1   # 11  (largest conv kernel)
PAD = NUM_KERNELS - 1              # 5   (spatial padding of the fused 11x11 conv)


def _round_up(x, m):
    return ((x + m - 1) // m) * m


def _tpu_flags():
    """(wide_mxu, vmem_cap_bytes) from the attached device kind (safe fallback)."""
    try:
        kind = jax.devices()[0].device_kind.lower()
    except Exception:
        kind = ""
    wide_mxu = not any(t in kind for t in ("v2", "v3", "v4", "v5"))   # v6e / v7x: 256-wide MXU
    vmem_cap = (64 << 20) if "v7" in kind else (100 << 20)            # v7x: 64 MiB physical
    return wide_mxu, vmem_cap


def _matmul_bias_kernel(x_ref, w_ref, b_ref, o_ref, acc_ref):
    # x_ref  : (1, TM, TK)  bf16  im2col rows
    # w_ref  : (TK, TCO)    bf16  folded weight slab tile
    # b_ref  : (1, TCO)     f32   folded bias
    # o_ref  : (1, TM, TCO) bf16  output tile (lane-dense, single store)
    # acc_ref: (TM, TCO)    f32   VMEM scratch accumulator
    k = pl.program_id(3)

    @pl.when(k == 0)
    def _():
        acc_ref[...] = jnp.broadcast_to(b_ref[...], acc_ref.shape)

    acc_ref[...] += jnp.dot(x_ref[0], w_ref[...],
                            preferred_element_type=jnp.float32)

    @pl.when(k == pl.num_programs(3) - 1)
    def _():
        o_ref[0] = acc_ref[...].astype(o_ref.dtype)


@jax.jit
def res_inception_block_v1(x_nchw, weights, biases, wm, bm):
    """Forward of Res_Inception_Block_V1.
    weights[i]: (Cout, Cin, 2i+1, 2i+1); biases[i]: (Cout,); wm: (Cout, Cin, 1, 1);
    bm: (Cout,). Input / output are NCHW (PyTorch layout)."""
    N, Cin, H, W = x_nchw.shape
    Cout = wm.shape[0]
    wide_mxu, vmem_cap = _tpu_flags()

    # ---- constant folding of the 6 branches + residual (runs once, fused by XLA) ----
    wsum = jnp.zeros((KMAX, KMAX, Cin, Cout), jnp.float32)
    for i, w in enumerate(weights):
        k = 2 * i + 1
        off = PAD - i
        wsum = wsum.at[off:off + k, off:off + k].add(
            jnp.transpose(w, (2, 3, 1, 0)).astype(jnp.float32))
    wsum = wsum / NUM_KERNELS                                     # mean over the 6 branches
    bsum = sum(b.astype(jnp.float32) for b in biases) / NUM_KERNELS

    if Cin != Cout:                    # match_dimensions 1x1 conv folded into centre tap
        wsum = wsum.at[PAD, PAD].add(jnp.transpose(wm[:, :, 0, 0], (1, 0)))
        bsum = bsum + bm.astype(jnp.float32)
    else:                              # identity residual (bf16-rounded; fine at 5e-2 tol)
        wsum = wsum.at[PAD, PAD].add(jnp.eye(Cin, dtype=jnp.float32))

    # ---- tiling parameters -----------------------------------------------------------
    M = H * W
    K_raw = KMAX * KMAX * Cin
    Coutp = _round_up(Cout, 128)                                   # lane-dense output
    TCO = 256 if (wide_mxu and Coutp % 256 == 0) else 128          # 128 on v5e-class MXU
    TK = min(_round_up(K_raw, 128), 1024)                          # deep MXU contraction
    Kp = _round_up(K_raw, TK)
    TM = min(512, _round_up(M, 16))
    Mp = _round_up(M, TM)
    Mt, COt, Kt = Mp // TM, Coutp // TCO, Kp // TK

    # ---- weight / bias slabs ---------------------------------------------------------
    w4 = jnp.zeros((KMAX, KMAX, Cin, Coutp), jnp.float32).at[..., :Cout].set(wsum)
    wflat = w4.reshape(K_raw, Coutp)
    wk = jnp.zeros((Kp, Coutp), jnp.float32).at[:K_raw, :].set(wflat).astype(jnp.bfloat16)
    bk = jnp.zeros((1, Coutp), jnp.float32).at[0, :Cout].set(bsum)

    # ---- full im2col in the wrapper (plain jnp ops; K = 121*Cin, padded) --------------
    x = jnp.transpose(x_nchw, (0, 2, 3, 1)).astype(jnp.bfloat16)   # NCHW -> NHWC, bf16
    xpad = jnp.pad(x, ((0, 0), (PAD, PAD), (PAD, PAD), (0, 0)))
    cols = [xpad[:, kh:kh + H, kw:kw + W, :]
            for kh in range(KMAX) for kw in range(KMAX)]           # (kh, kw, ci) fastest=ci
    x2 = jnp.concatenate(cols, axis=-1).reshape(N, M, K_raw)
    x2p = jnp.pad(x2, ((0, 0), (0, Mp - M), (0, Kp - K_raw)))      # (N, Mp, Kp) bf16

    # ---- VMEM budget (lane/sublane-aligned blocks, double-buffered) -------------------
    xb = TM * TK * 2
    wb = TK * TCO * 2
    bb = 8 * TCO * 4
    ob = TM * TCO * 2
    acc = TM * TCO * 4
    est = 2 * (xb + wb + bb + ob) + acc
    vmem_limit = int(min(vmem_cap, max(2 * est, 32 << 20)))

    # ---- grid ordering: larger operand on the inner-constant axis ---------------------
    full_x = N * Mp * Kp * 2
    full_w = Kp * Coutp * 2
    co_inner = (Kt > 1) or (full_x + N * Mt * full_w <= COt * full_x + full_w)
    if co_inner:
        grid = (N, Mt, COt, Kt)
        x_map = lambda b, m, co, k: (b, m, k)
        w_map = lambda b, m, co, k: (k, co)
        b_map = lambda b, m, co, k: (0, co)
        o_map = lambda b, m, co, k: (b, m, co)
    else:
        grid = (COt, N, Mt, Kt)
        x_map = lambda co, b, m, k: (b, m, k)
        w_map = lambda co, b, m, k: (k, co)
        b_map = lambda co, b, m, k: (0, co)
        o_map = lambda co, b, m, k: (b, m, co)

    out2 = pl.pallas_call(
        _matmul_bias_kernel,
        out_shape=jax.ShapeDtypeStruct((N, Mp, Coutp), jnp.bfloat16),
        grid=grid,
        in_specs=[
            pl.BlockSpec((1, TM, TK), x_map),
            pl.BlockSpec((TK, TCO), w_map),
            pl.BlockSpec((1, TCO), b_map),
        ],
        out_specs=pl.BlockSpec((1, TM, TCO), o_map),
        scratch_shapes=[pltpu.VMEM((TM, TCO), jnp.float32)],
        compiler_params=pltpu.CompilerParams(
            dimension_semantics=("parallel", "parallel", "parallel", "arbitrary"),
            vmem_limit_bytes=vmem_limit),
    )(x2p, wk, bk)

    # Un-pad M / Cout and restore NCHW (cheap slice / transpose on the small output).
    out = out2[:, :M, :Cout].reshape(N, H, W, Cout)
    return jnp.transpose(out, (0, 3, 1, 2)).astype(jnp.float32)


def make_params(key, in_channels, out_channels, bias_std=0.05):
    """kaiming_normal_(mode='fan_out', relu) weights.  The PyTorch module zero-inits
    biases; small non-zero biases are used here to exercise the kernel's bias path
    (forward semantics are identical)."""
    keys = jax.random.split(key, 2 * NUM_KERNELS + 2)
    weights, biases = [], []
    for i in range(NUM_KERNELS):
        k = 2 * i + 1
        std = (2.0 / (out_channels * k * k)) ** 0.5
        weights.append(std * jax.random.normal(
            keys[2 * i], (out_channels, in_channels, k, k), jnp.float32))
        biases.append(bias_std * jax.random.normal(
            keys[2 * i + 1], (out_channels,), jnp.float32))
    std_m = (2.0 / out_channels) ** 0.5
    wm = std_m * jax.random.normal(keys[-2], (out_channels, in_channels, 1, 1), jnp.float32)
    bm = bias_std * jax.random.normal(keys[-1], (out_channels,), jnp.float32)
    return weights, biases, wm, bm


def reference(x_nchw, weights, biases, wm, bm):
    """Pure-JAX (lax.conv, f32) reference matching the PyTorch forward."""
    dn = ("NCHW", "OIHW", "NCHW")
    outs = []
    for i in range(NUM_KERNELS):
        o = lax.conv_general_dilated(x_nchw, weights[i], (1, 1),
                                     [(i, i), (i, i)], dimension_numbers=dn)
        outs.append(o + biases[i][None, :, None, None])
    res = jnp.mean(jnp.stack(outs, axis=-1), axis=-1)
    Cin, Cout = x_nchw.shape[1], wm.shape[0]
    if Cin != Cout:
        xr = lax.conv_general_dilated(x_nchw, wm, (1, 1), [(0, 0), (0, 0)],
                                      dimension_numbers=dn)
        xr = xr + bm[None, :, None, None]
    else:
        xr = x_nchw
    return res + xr


if __name__ == "__main__":
    key = jax.random.PRNGKey(0)
    # second case (Cin == Cout) exercises the identity-residual fold
    for (cin, cout) in ((4, 8), (8, 8)):
        key, kx, kp = jax.random.split(key, 3)
        N, H, W = 2, 16, 16
        x = jax.random.normal(kx, (N, cin, H, W), jnp.float32)
        weights, biases, wm, bm = make_params(kp, cin, cout)

        out = jax.block_until_ready(res_inception_block_v1(x, weights, biases, wm, bm))
        ref = jax.block_until_ready(reference(x, weights, biases, wm, bm))

        assert out.shape == (N, cout, H, W), out.shape
        max_err = float(jnp.max(jnp.abs(out - ref)))
        # bf16 MXU operands / bf16 output store with f32 accumulation -> bf16 tolerance
        assert jnp.allclose(out, ref, atol=5e-2, rtol=5e-2), (
            f"max abs err {max_err} for Cin={cin}, Cout={cout}")
    print("KERNEL_OK")
</pallas_src>

<mosaic_0001>
module attributes {stable_mosaic.version = 11 : i64} {
  func.func @_matmul_bias_kernel(%arg0: i32, %arg1: i32, %arg2: i32, %arg3: i32, %arg4: memref<1x256x512xbf16, #tpu.memory_space<vmem>>, %arg5: memref<512x128xbf16, #tpu.memory_space<vmem>>, %arg6: memref<1x128xf32, #tpu.memory_space<vmem>>, %arg7: memref<1x256x128xbf16, #tpu.memory_space<vmem>>, %arg8: memref<256x128xf32, #tpu.memory_space<vmem>>) attributes {dimension_semantics = [#tpu.dimension_semantics<parallel>, #tpu.dimension_semantics<parallel>, #tpu.dimension_semantics<parallel>, #tpu.dimension_semantics<arbitrary>], iteration_bounds = array<i64: 1, 2, 1, 1>, scalar_prefetch = 0 : i64, scratch_operands = 1 : i64, tpu.core_type = #tpu.core_type<tc>, window_params = [{transform_indices = @transform_0, window_bounds = array<i64: 1, 256, 512>}, {transform_indices = @transform_1, window_bounds = array<i64: 512, 128>}, {transform_indices = @transform_2, window_bounds = array<i64: 1, 128>}, {transform_indices = @transform_3, window_bounds = array<i64: 1, 256, 128>}]} {
    %c0_i32 = arith.constant 0 : i32
    %0 = arith.cmpi eq, %arg3, %c0_i32 : i32
    %1 = arith.extui %0 : i1 to i32
    %c0_i32_0 = arith.constant 0 : i32
    %2 = arith.cmpi ne, %1, %c0_i32_0 : i32
    scf.if %2 {
      %c0_11 = arith.constant 0 : index
      %c0_12 = arith.constant 0 : index
      %13 = vector.load %arg6[%c0_11, %c0_12] : memref<1x128xf32, #tpu.memory_space<vmem>>, vector<1x128xf32>
      %14 = vector.shape_cast %13 : vector<1x128xf32> to vector<1x128xf32>
      %15 = vector.broadcast %14 : vector<1x128xf32> to vector<256x128xf32>
      %c0_13 = arith.constant 0 : index
      %c0_14 = arith.constant 0 : index
      %16 = vector.load %arg8[%c0_13, %c0_14] : memref<256x128xf32, #tpu.memory_space<vmem>>, vector<256x128xf32>
      tpu.vector_store %arg8[%c0_13, %c0_14], %15 {strides = array<i32>} : memref<256x128xf32, #tpu.memory_space<vmem>>, vector<256x128xf32>,
    } else {
    }
    %c0 = arith.constant 0 : index
    %c0_1 = arith.constant 0 : index
    %3 = vector.load %arg8[%c0, %c0_1] : memref<256x128xf32, #tpu.memory_space<vmem>>, vector<256x128xf32>
    %c0_2 = arith.constant 0 : index
    %c0_3 = arith.constant 0 : index
    %c0_4 = arith.constant 0 : index
    %4 = vector.load %arg4[%c0_2, %c0_3, %c0_4] : memref<1x256x512xbf16, #tpu.memory_space<vmem>>, vector<1x256x512xbf16>
    %5 = vector.shape_cast %4 : vector<1x256x512xbf16> to vector<256x512xbf16>
    %c0_5 = arith.constant 0 : index
    %c0_6 = arith.constant 0 : index
    %6 = vector.load %arg5[%c0_5, %c0_6] : memref<512x128xbf16, #tpu.memory_space<vmem>>, vector<512x128xbf16>
    %cst = arith.constant dense<0.000000e+00> : vector<256x128xf32>
    %7 = tpu.matmul %5, %6, %cst {dimension_numbers = #tpu.dot_dimension_numbers<[1], [0], [0], [1], [0, 0, 1, 1], [], []>} : vector<256x512xbf16>, vector<512x128xbf16>, vector<256x128xf32> -> vector<256x128xf32>
    %8 = arith.addf %3, %7 : vector<256x128xf32>
    %c0_7 = arith.constant 0 : index
    %c0_8 = arith.constant 0 : index
    %9 = vector.load %arg8[%c0_7, %c0_8] : memref<256x128xf32, #tpu.memory_space<vmem>>, vector<256x128xf32>
    tpu.vector_store %arg8[%c0_7, %c0_8], %8 {strides = array<i32>} : memref<256x128xf32, #tpu.memory_space<vmem>>, vector<256x128xf32>,
    %c0_i32_9 = arith.constant 0 : i32
    %10 = arith.cmpi eq, %arg3, %c0_i32_9 : i32
    %11 = arith.extui %10 : i1 to i32
    %c0_i32_10 = arith.constant 0 : i32
    %12 = arith.cmpi ne, %11, %c0_i32_10 : i32
    scf.if %12 {
      %c0_11 = arith.constant 0 : index
      %c0_12 = arith.constant 0 : index
      %13 = vector.load %arg8[%c0_11, %c0_12] : memref<256x128xf32, #tpu.memory_space<vmem>>, vector<256x128xf32>
      %14 = arith.truncf %13 : vector<256x128xf32> to vector<256x128xbf16>
      %c0_13 = arith.constant 0 : index
      %c0_14 = arith.constant 0 : index
      %c0_15 = arith.constant 0 : index
      %15 = vector.load %arg7[%c0_13, %c0_14, %c0_15] : memref<1x256x128xbf16, #tpu.memory_space<vmem>>, vector<1x256x128xbf16>
      %16 = vector.shape_cast %15 : vector<1x256x128xbf16> to vector<256x128xbf16>
      %17 = vector.shape_cast %14 : vector<256x128xbf16> to vector<1x256x128xbf16>
      tpu.vector_store %arg7[%c0_13, %c0_14, %c0_15], %17 {strides = array<i32>} : memref<1x256x128xbf16, #tpu.memory_space<vmem>>, vector<1x256x128xbf16>,
    } else {
    }
    return
  }
  func.func @transform_0(%arg0: i32, %arg1: i32, %arg2: i32, %arg3: i32) -> (i32, i32, i32) {
    %c0_i32 = arith.constant 0 : i32
    return %arg1, %arg2, %arg3 : i32, i32, i32
  }
  func.func @transform_1(%arg0: i32, %arg1: i32, %arg2: i32, %arg3: i32) -> (i32, i32) {
    %c0_i32 = arith.constant 0 : i32
    return %arg3, %arg0 : i32, i32
  }
  func.func @transform_2(%arg0: i32, %arg1: i32, %arg2: i32, %arg3: i32) -> (i32, i32) {
    %c0_i32 = arith.constant 0 : i32
    %c0_i32_0 = arith.constant 0 : i32
    return %c0_i32, %arg0 : i32, i32
  }
  func.func @transform_3(%arg0: i32, %arg1: i32, %arg2: i32, %arg3: i32) -> (i32, i32, i32) {
    %c0_i32 = arith.constant 0 : i32
    return %arg1, %arg2, %arg0 : i32, i32, i32
  }
}

</mosaic_0001>

<llo_original>
// kernel: res_inception_block_v1.1
$region0: #{res_inception_block_v1.1}
  #allocation0 [shape = 'u32[]', space=smem, size = 0x4, offset = 0x4, fixed_abs, tag = 'smem constant byte address 0x4 - core index']
  #allocation1 [shape = 'u32[144,128]{1,0:T(1,128)}', space=vmem, size = 0x12000, scoped, tag = 'internal scratch']
  #allocation2 [shape = 'f32[256,128]{1,0:T(8,128)}', space=vmem, size = 0x20000, scoped, tag = 'scratch operand']
  %s0 = inlined_call_operand.vmem [shape: bf16[2,256,512], index: 0, kind: input, shape index: {}]
  %s1 = inlined_call_operand.vmem [shape: bf16[512,128], index: 1, kind: input, shape index: {}]
  %s2 = inlined_call_operand.vmem [shape: f32[1,128], index: 2, kind: input, shape index: {}]
  %s3 = inlined_call_operand.vmem [shape: bf16[2,256,128], index: 3, kind: output, shape index: {}]
  %s4 = sld [smem:[#allocation0]]
  $region53: #{res_inception_block_v1.1} parent=0
    _
  %s6 = ssub.s32 1, %s4
  %s7 = scalar_select 0, %s6, %s4
  loop: start=0, step=1, limit=4
  $region2: #{res_inception_block_v1.1} parent=0 // loop_pre_header
    _
  $region3: #{res_inception_block_v1.1} parent=0 // loop_header
    %s9 = sphi 0, %s13
    %p10 = scmp.ge.s32.totalorder %s9, 4
    %s16 = sphi 0, %s42
    %s17 = sphi 0, %s38
    %s18 = sphi 0, %s34
    %s19 = sphi 0, %s30
    %s20 = sphi 0, %s16
    %s21 = sphi 0, %s17
    %s22 = sphi 0, %s18
    %s23 = sphi 0, %s19
    %s24 = sphi 0, %s20
    %s25 = sphi 0, %s21
    %s26 = sphi 0, %s22
    %s27 = sphi 0, %s23
    %s49 = sphi 0, %s51
    %s52 = sphi 0, %s49
    %s53 = sphi 0, %s52
    %s69 = sphi 0, %s53
    %s77 = sphi 0, %s79
    %s80 = sphi 0, %s77
    %s81 = sphi 0, %s80
    %s97 = sphi 0, %s81
    %s103 = sphi 0, %s105
    %s106 = sphi 0, %s103
    %s107 = sphi 0, %s106
    %s123 = sphi 0, %s107
    %s133 = sphi 0, %s135
    %s136 = sphi 0, %s133
    %s137 = sphi 0, %s136
    %s153 = sphi 0, %s137
  $region4: #{res_inception_block_v1.1} parent=0 // loop_header_branch
    %12 = sbr.rel (%p10) target = $region8
  $region5: #{res_inception_block_v1.1} parent=0 // loop_body
    %s14 = ssub.s32 %s9, 1
    %s15 = ssub.s32 %s9, 2
    %s28 = sadd.s32 1, %s19
    %p29 = scmp.ge.s32.totalorder %s28, 1
    %s30 = scalar_select %p29, 0, %s28
    %s31 = sadd.s32 1, %s18
    %s32 = scalar_select %p29, %s31, %s18
    %p33 = scmp.ge.s32.totalorder %s32, 1
    %s34 = scalar_select %p33, 0, %s32
    %s35 = sadd.s32 1, %s17
    %s36 = scalar_select %p33, %s35, %s17
    %p37 = scmp.ge.s32.totalorder %s36, 2
    %s38 = scalar_select %p37, 0, %s36
    %s39 = sadd.s32 1, %s16
    %s40 = scalar_select %p37, %s39, %s16
    %p41 = scmp.ge.s32.totalorder %s40, 1
    %s42 = scalar_select %p41, 0, %s40
    %s43 = ssub.s32 %s17, %s38
    %s44 = ssub.s32 %s18, %s34
    %s45 = sor.u32 %s43, %s44
    %s46 = ssub.s32 %s19, %s30
    %s47 = sor.u32 %s45, %s46
    %p48 = scmp.eq.s32.totalorder %s47, 0
    %s50 = sadd.s32 %s49, 1
    %s51 = scalar_select %p48, %s49, %s50
    %p54 = pneg %p48
    %p55 = scmp.eq.s32.totalorder %s9, 1
    %p56 = por %p54, %p55
    %p57 = scmp.ne.s32.totalorder %s49, %s52
    %p58 = scmp.eq.s32.totalorder %s9, 0
    %p59 = por %p57, %p58
    %p60 = scmp.ne.s32.totalorder %s49, %s52
    %p61 = scmp.eq.s32.totalorder %s14, 1
    %p62 = por %p60, %p61
    %p63 = scmp.ne.s32.totalorder %s52, %s53
    %p64 = scmp.eq.s32.totalorder %s14, 0
    %p65 = por %p63, %p64
    %p66 = scmp.ne.s32.totalorder %s52, %s53
    %p67 = scmp.eq.s32.totalorder %s15, 1
    %p68 = por %p66, %p67
    %p70 = scmp.ne.s32.totalorder %s53, %s69
    %p71 = scmp.eq.s32.totalorder %s15, 0
    %p72 = por %p70, %p71
    %s73 = ssub.s32 %s19, %s30
    %s74 = ssub.s32 %s16, %s42
    %s75 = sor.u32 %s73, %s74
    %p76 = scmp.eq.s32.totalorder %s75, 0
    %s78 = sadd.s32 %s77, 1
    %s79 = scalar_select %p76, %s77, %s78
    %p82 = pneg %p76
    %p83 = scmp.eq.s32.totalorder %s9, 1
    %p84 = por %p82, %p83
    %p85 = scmp.ne.s32.totalorder %s77, %s80
    %p86 = scmp.eq.s32.totalorder %s9, 0
    %p87 = por %p85, %p86
    %p88 = scmp.ne.s32.totalorder %s77, %s80
    %p89 = scmp.eq.s32.totalorder %s14, 1
    %p90 = por %p88, %p89
    %p91 = scmp.ne.s32.totalorder %s80, %s81
    %p92 = scmp.eq.s32.totalorder %s14, 0
    %p93 = por %p91, %p92
    %p94 = scmp.ne.s32.totalorder %s80, %s81
    %p95 = scmp.eq.s32.totalorder %s15, 1
    %p96 = por %p94, %p95
    %p98 = scmp.ne.s32.totalorder %s81, %s97
    %p99 = scmp.eq.s32.totalorder %s15, 0
    %p100 = por %p98, %p99
    %s101 = ssub.s32 %s16, %s42
    %p102 = scmp.eq.s32.totalorder %s101, 0
    %s104 = sadd.s32 %s103, 1
    %s105 = scalar_select %p102, %s103, %s104
    %p108 = pneg %p102
    %p109 = scmp.eq.s32.totalorder %s9, 1
    %p110 = por %p108, %p109
    %p111 = scmp.ne.s32.totalorder %s103, %s106
    %p112 = scmp.eq.s32.totalorder %s9, 0
    %p113 = por %p111, %p112
    %p114 = scmp.ne.s32.totalorder %s103, %s106
    %p115 = scmp.eq.s32.totalorder %s14, 1
    %p116 = por %p114, %p115
    %p117 = scmp.ne.s32.totalorder %s106, %s107
    %p118 = scmp.eq.s32.totalorder %s14, 0
    %p119 = por %p117, %p118
    %p120 = scmp.ne.s32.totalorder %s106, %s107
    %p121 = scmp.eq.s32.totalorder %s15, 1
    %p122 = por %p120, %p121
    %p124 = scmp.ne.s32.totalorder %s107, %s123
    %p125 = scmp.eq.s32.totalorder %s15, 0
    %p126 = por %p124, %p125
    %s127 = ssub.s32 %s17, %s38
    %s128 = ssub.s32 %s18, %s34
    %s129 = sor.u32 %s127, %s128
    %s130 = ssub.s32 %s16, %s42
    %s131 = sor.u32 %s129, %s130
    %p132 = scmp.eq.s32.totalorder %s131, 0
    %s134 = sadd.s32 %s133, 1
    %s135 = scalar_select %p132, %s133, %s134
    %p138 = pneg %p132
    %p139 = scmp.eq.s32.totalorder %s9, 1
    %p140 = por %p138, %p139
    %p141 = scmp.ne.s32.totalorder %s133, %s136
    %p142 = scmp.eq.s32.totalorder %s9, 0
    %p143 = por %p141, %p142
    %p144 = scmp.ne.s32.totalorder %s133, %s136
    %p145 = scmp.eq.s32.totalorder %s14, 1
    %p146 = por %p144, %p145
    %p147 = scmp.ne.s32.totalorder %s136, %s137
    %p148 = scmp.eq.s32.totalorder %s14, 0
    %p149 = por %p147, %p148
    %p150 = scmp.ne.s32.totalorder %s136, %s137
    %p151 = scmp.eq.s32.totalorder %s15, 1
    %p152 = por %p150, %p151
    %p154 = scmp.ne.s32.totalorder %s137, %s153
    %p155 = scmp.eq.s32.totalorder %s15, 0
    %p156 = por %p154, %p155
    %p157 = scmp.le.s32.totalorder 1, %s9
    %p158 = scmp.lt.s32.totalorder %s9, 3
    %p159 = pnand %p157, %p158
    %p160 = pneg %p159
    // Predicated region
    $region9: #{res_inception_block_v1.1} parent=5 // pred_check
      _
    $region10: #{res_inception_block_v1.1} parent=5 // pred_check_branch
      %162 = sbr.rel (%p159) target = $region12
    $region11: #{res_inception_block_v1.1} parent=5 // pred_region
      %s163 = ssub.s32 %s9, 1
      // Predicated region
      $region13: #{res_inception_block_v1.1} parent=11 // pred_check
        %p164 = pneg %p93
      $region14: #{res_inception_block_v1.1} parent=11 // pred_check_branch
        %166 = sbr.rel (%p164) target = $region16
      $region15: #{res_inception_block_v1.1} parent=11 // pred_region
        %s167 = smul.u32 64, %s23
        %p168 = scmp.lt.s32.totalorder %s167, 63
        %s169 = scalar_select %p168, %s167, 63
        %p170 = scmp.lt.s32.totalorder %s20, 0
        %s171 = scalar_select %p170, %s20, 0
        %s172 = sadd.s32 %s171, %s169
        %s173 = smul.addr %s172, 4
        %s174 = scalar_lea.vmem %s1, %s173
        %s175 = smul.u32 64, %s23
      $region16: #{res_inception_block_v1.1} parent=11 // pred_fallthru
        _
      // Predicated region
      $region17: #{res_inception_block_v1.1} parent=11 // pred_check
        %p176 = pneg %p119
      $region18: #{res_inception_block_v1.1} parent=11 // pred_check_branch
        %178 = sbr.rel (%p176) target = $region20
      $region19: #{res_inception_block_v1.1} parent=11 // pred_region
        %p179 = scmp.lt.s32.totalorder %s20, 0
        %s180 = scalar_select %p179, %s20, 0
        %s181 = scalar_lea.vmem %s2, %s180
      $region20: #{res_inception_block_v1.1} parent=11 // pred_fallthru
        _
    $region12: #{res_inception_block_v1.1} parent=5 // pred_fallthru
      _
    %p182 = scmp.lt.s32.totalorder %s9, 2
    // Predicated region
    $region21: #{res_inception_block_v1.1} parent=5 // pred_check
      %p183 = pneg %p182
    $region22: #{res_inception_block_v1.1} parent=5 // pred_check_branch
      %185 = sbr.rel (%p183) target = $region24
    $region23: #{res_inception_block_v1.1} parent=5 // pred_region
      // Predicated region
      $region25: #{res_inception_block_v1.1} parent=23 // pred_check
        %p186 = pneg %p59
      $region26: #{res_inception_block_v1.1} parent=23 // pred_check_branch
        %188 = sbr.rel (%p186) target = $region28
      $region27: #{res_inception_block_v1.1} parent=23 // pred_region
        %s189 = smul.u32 32, %s18
        %s190 = smul.u32 4, %s19
        %p191 = scmp.lt.s32.totalorder %s17, 1
        %s192 = scalar_select %p191, %s17, 1
        %p193 = scmp.lt.s32.totalorder %s189, 31
        %s194 = scalar_select %p193, %s189, 31
        %p195 = scmp.lt.s32.totalorder %s190, 3
        %s196 = scalar_select %p195, %s190, 3
        %s197 = smul.addr %s194, 4
        %s198 = sadd.s32 %s196, %s197
        %s199 = smul.addr %s192, 128
        %s200 = sadd.s32 %s198, %s199
        %s201 = smul.addr %s200, 4
        %s202 = scalar_lea.vmem %s0, %s201
        %s203 = smul.u32 32, %s18
        %s204 = smul.u32 4, %s19
      $region28: #{res_inception_block_v1.1} parent=23 // pred_fallthru
        _
    $region24: #{res_inception_block_v1.1} parent=5 // pred_fallthru
      _
    %p205 = scmp.le.s32.totalorder 1, %s9
    %p206 = scmp.lt.s32.totalorder %s9, 3
    %p207 = pnand %p205, %p206
    %p208 = pneg %p207
    // Predicated region
    $region29: #{res_inception_block_v1.1} parent=5 // pred_check
      _
    $region30: #{res_inception_block_v1.1} parent=5 // pred_check_branch
      %210 = sbr.rel (%p207) target = $region32
    $region31: #{res_inception_block_v1.1} parent=5 // pred_region
      %s211 = ssub.s32 %s9, 1
      %s212 = smul.u32 32, %s22
      %s213 = smul.u32 4, %s23
      %p214 = scmp.lt.s32.totalorder %s21, 1
      %s215 = scalar_select %p214, %s21, 1
      %p216 = scmp.lt.s32.totalorder %s212, 31
      %s217 = scalar_select %p216, %s212, 31
      %p218 = scmp.lt.s32.totalorder %s213, 3
      %s219 = scalar_select %p218, %s213, 3
      %s220 = smul.addr %s217, 4
      %s221 = sadd.s32 %s219, %s220
      %s222 = smul.addr %s215, 128
      %s223 = sadd.s32 %s221, %s222
      %s224 = smul.addr %s223, 4
      %s225 = scalar_lea.vmem %s0, %s224
      %p226 = pneg %p65
      %p227 = pneg %p62
      %s228 = smul.u32 64, %s23
      %p229 = scmp.lt.s32.totalorder %s228, 63
      %s230 = scalar_select %p229, %s228, 63
      %p231 = scmp.lt.s32.totalorder %s20, 0
      %s232 = scalar_select %p231, %s20, 0
      %s233 = sadd.s32 %s232, %s230
      %s234 = smul.addr %s233, 4
      %s235 = scalar_lea.vmem %s1, %s234
      %p236 = pneg %p93
      %p237 = pneg %p90
      %p238 = scmp.lt.s32.totalorder %s20, 0
      %s239 = scalar_select %p238, %s20, 0
      %s240 = scalar_lea.vmem %s2, %s239
      %p241 = pneg %p119
      %p242 = pneg %p116
      %p243 = pneg %p149
      %p244 = pneg %p146
      %s245 = smul.u32 32, %s22
      %p246 = scmp.lt.s32.totalorder %s21, 1
      %s247 = scalar_select %p246, %s21, 1
      %p248 = scmp.lt.s32.totalorder %s245, 31
      %s249 = scalar_select %p248, %s245, 31
      %p250 = scmp.lt.s32.totalorder %s20, 0
      %s251 = scalar_select %p250, %s20, 0
      %s252 = sadd.s32 %s251, %s249
      %s253 = smul.addr %s247, 32
      %s254 = sadd.s32 %s252, %s253
      %s255 = smul.addr %s254, 4
      %s256 = scalar_lea.vmem %s3, %s255
      %s257 = smul.u32 32, %s22
      %s258 = smul.u32 4, %s23
      %p259 = scmp.lt.s32.totalorder %s21, 1
      %s260 = scalar_select %p259, %s21, 1
      %p261 = scmp.lt.s32.totalorder %s257, 31
      %s262 = scalar_select %p261, %s257, 31
      %p263 = scmp.lt.s32.totalorder %s258, 3
      %s264 = scalar_select %p263, %s258, 3
      %s265 = smul.addr %s262, 4
      %s266 = sadd.s32 %s264, %s265
      %s267 = smul.addr %s260, 128
      %s268 = sadd.s32 %s266, %s267
      %s269 = smul.addr %s268, 4
      %s270 = scalar_lea.vmem %s0, %s269
      %s271 = smul.u32 32, %s22
      %s272 = smul.u32 4, %s23
      %s273 = smul.u32 64, %s23
      %p274 = scmp.lt.s32.totalorder %s273, 63
      %s275 = scalar_select %p274, %s273, 63
      %p276 = scmp.lt.s32.totalorder %s20, 0
      %s277 = scalar_select %p276, %s20, 0
      %s278 = sadd.s32 %s277, %s275
      %s279 = smul.addr %s278, 4
      %s280 = scalar_lea.vmem %s1, %s279
      %s281 = smul.u32 64, %s23
      %p282 = scmp.lt.s32.totalorder %s20, 0
      %s283 = scalar_select %p282, %s20, 0
      %s284 = scalar_lea.vmem %s2, %s283
      %s285 = smul.u32 32, %s22
      %p286 = scmp.lt.s32.totalorder %s21, 1
      %s287 = scalar_select %p286, %s21, 1
      %p288 = scmp.lt.s32.totalorder %s285, 31
      %s289 = scalar_select %p288, %s285, 31
      %p290 = scmp.lt.s32.totalorder %s20, 0
      %s291 = scalar_select %p290, %s20, 0
      %s292 = sadd.s32 %s291, %s289
      %s293 = smul.addr %s287, 32
      %s294 = sadd.s32 %s292, %s293
      %s295 = smul.addr %s294, 4
      %s296 = scalar_lea.vmem %s3, %s295
      %s297 = smul.u32 32, %s22
      %p299 = scmp.eq.s32.totalorder %s23, 0
      // Predicated region
      $region33: #{res_inception_block_v1.1} parent=31 // pred_check
        %p300 = pneg %p299
      $region34: #{res_inception_block_v1.1} parent=31 // pred_check_branch
        %302 = sbr.rel (%p300) target = $region36
      $region35: #{res_inception_block_v1.1} parent=31 // pred_region
        %v303 = vld [vmem:[%s284] sm:$0x1]
        %v305 = vlaneseq
        %v306 = vshrl.u32 %v305, 7
        %v307 = vsub.s32 0, %v306
        %v308 = vrot.slane %v303, %v307
        %310 = vst [vmem:[#allocation2] sm:$0xff] %v308
        %311 = vst [vmem:[#allocation2 + $0x8] sm:$0xff] %v308
        %312 = vst [vmem:[#allocation2 + $0x10] sm:$0xff] %v308
        %313 = vst [vmem:[#allocation2 + $0x18] sm:$0xff] %v308
        %314 = vst [vmem:[#allocation2 + $0x20] sm:$0xff] %v308
        %315 = vst [vmem:[#allocation2 + $0x28] sm:$0xff] %v308
        %316 = vst [vmem:[#allocation2 + $0x30] sm:$0xff] %v308
        %317 = vst [vmem:[#allocation2 + $0x38] sm:$0xff] %v308
        %318 = vst [vmem:[#allocation2 + $0x40] sm:$0xff] %v308
        %319 = vst [vmem:[#allocation2 + $0x48] sm:$0xff] %v308
        %320 = vst [vmem:[#allocation2 + $0x50] sm:$0xff] %v308
        %321 = vst [vmem:[#allocation2 + $0x58] sm:$0xff] %v308
        %322 = vst [vmem:[#allocation2 + $0x60] sm:$0xff] %v308
        %323 = vst [vmem:[#allocation2 + $0x68] sm:$0xff] %v308
        %324 = vst [vmem:[#allocation2 + $0x70] sm:$0xff] %v308
        %325 = vst [vmem:[#allocation2 + $0x78] sm:$0xff] %v308
        %326 = vst [vmem:[#allocation2 + $0x80] sm:$0xff] %v308
        %327 = vst [vmem:[#allocation2 + $0x88] sm:$0xff] %v308
        %328 = vst [vmem:[#allocation2 + $0x90] sm:$0xff] %v308
        %329 = vst [vmem:[#allocation2 + $0x98] sm:$0xff] %v308
        %330 = vst [vmem:[#allocation2 + $0xa0] sm:$0xff] %v308
        %331 = vst [vmem:[#allocation2 + $0xa8] sm:$0xff] %v308
        %332 = vst [vmem:[#allocation2 + $0xb0] sm:$0xff] %v308
        %333 = vst [vmem:[#allocation2 + $0xb8] sm:$0xff] %v308
        %334 = vst [vmem:[#allocation2 + $0xc0] sm:$0xff] %v308
        %335 = vst [vmem:[#allocation2 + $0xc8] sm:$0xff] %v308
        %336 = vst [vmem:[#allocation2 + $0xd0] sm:$0xff] %v308
        %337 = vst [vmem:[#allocation2 + $0xd8] sm:$0xff] %v308
        %338 = vst [vmem:[#allocation2 + $0xe0] sm:$0xff] %v308
        %339 = vst [vmem:[#allocation2 + $0xe8] sm:$0xff] %v308
        %340 = vst [vmem:[#allocation2 + $0xf0] sm:$0xff] %v308
        %341 = vst [vmem:[#allocation2 + $0xf8] sm:$0xff] %v308
      $region36: #{res_inception_block_v1.1} parent=31 // pred_fallthru
        _
      %v342 = vld [vmem:[#allocation2] sm:$0xff]
      %v343 = vld [vmem:[#allocation2 + $0x8] sm:$0xff]
      %v344 = vld [vmem:[#allocation2 + $0x10] sm:$0xff]
      %v345 = vld [vmem:[#allocation2 + $0x18] sm:$0xff]
      %v346 = vld [vmem:[#allocation2 + $0x20] sm:$0xff]
      %v347 = vld [vmem:[#allocation2 + $0x28] sm:$0xff]
      %v348 = vld [vmem:[#allocation2 + $0x30] sm:$0xff]
      %v349 = vld [vmem:[#allocation2 + $0x38] sm:$0xff]
      %v350 = vld [vmem:[#allocation2 + $0x40] sm:$0xff]
      %v351 = vld [vmem:[#allocation2 + $0x48] sm:$0xff]
      %v352 = vld [vmem:[#allocation2 + $0x50] sm:$0xff]
      %v353 = vld [vmem:[#allocation2 + $0x58] sm:$0xff]
      %v354 = vld [vmem:[#allocation2 + $0x60] sm:$0xff]
      %v355 = vld [vmem:[#allocation2 + $0x68] sm:$0xff]
      %v356 = vld [vmem:[#allocation2 + $0x70] sm:$0xff]
      %v357 = vld [vmem:[#allocation2 + $0x78] sm:$0xff]
      %v358 = vld [vmem:[#allocation2 + $0x80] sm:$0xff]
      %v359 = vld [vmem:[#allocation2 + $0x88] sm:$0xff]
      %v360 = vld [vmem:[#allocation2 + $0x90] sm:$0xff]
      %v361 = vld [vmem:[#allocation2 + $0x98] sm:$0xff]
      %v362 = vld [vmem:[#allocation2 + $0xa0] sm:$0xff]
      %v363 = vld [vmem:[#allocation2 + $0xa8] sm:$0xff]
      %v364 = vld [vmem:[#allocation2 + $0xb0] sm:$0xff]
      %v365 = vld [vmem:[#allocation2 + $0xb8] sm:$0xff]
      %v366 = vld [vmem:[#allocation2 + $0xc0] sm:$0xff]
      %v367 = vld [vmem:[#allocation2 + $0xc8] sm:$0xff]
      %v368 = vld [vmem:[#allocation2 + $0xd0] sm:$0xff]
      %v369 = vld [vmem:[#allocation2 + $0xd8] sm:$0xff]
      %v370 = vld [vmem:[#allocation2 + $0xe0] sm:$0xff]
      %v371 = vld [vmem:[#allocation2 + $0xe8] sm:$0xff]
      %v372 = vld [vmem:[#allocation2 + $0xf0] sm:$0xff]
      %v373 = vld [vmem:[#allocation2 + $0xf8] sm:$0xff]
      %v374 = vld [vmem:[%s270] sm:$0xff]
      %v375 = vld [vmem:[%s270 + $0x8] sm:$0xff]
      %v376 = vld [vmem:[%s270 + $0x10] sm:$0xff]
      %v377 = vld [vmem:[%s270 + $0x18] sm:$0xff]
      %v378 = vld [vmem:[%s270 + $0x20] sm:$0xff]
      %v379 = vld [vmem:[%s270 + $0x28] sm:$0xff]
      %v380 = vld [vmem:[%s270 + $0x30] sm:$0xff]
      %v381 = vld [vmem:[%s270 + $0x38] sm:$0xff]
      %v382 = vld [vmem:[%s270 + $0x40] sm:$0xff]
      %v383 = vld [vmem:[%s270 + $0x48] sm:$0xff]
      %v384 = vld [vmem:[%s270 + $0x50] sm:$0xff]
      %v385 = vld [vmem:[%s270 + $0x58] sm:$0xff]
      %v386 = vld [vmem:[%s270 + $0x60] sm:$0xff]
      %v387 = vld [vmem:[%s270 + $0x68] sm:$0xff]
      %v388 = vld [vmem:[%s270 + $0x70] sm:$0xff]
      %v389 = vld [vmem:[%s270 + $0x78] sm:$0xff]
      %v390 = vld [vmem:[%s270 + $0x80] sm:$0xff]
      %v391 = vld [vmem:[%s270 + $0x88] sm:$0xff]
      %v392 = vld [vmem:[%s270 + $0x90] sm:$0xff]
      %v393 = vld [vmem:[%s270 + $0x98] sm:$0xff]
      %v394 = vld [vmem:[%s270 + $0xa0] sm:$0xff]
      %v395 = vld [vmem:[%s270 + $0xa8] sm:$0xff]
      %v396 = vld [vmem:[%s270 + $0xb0] sm:$0xff]
      %v397 = vld [vmem:[%s270 + $0xb8] sm:$0xff]
      %v398 = vld [vmem:[%s270 + $0xc0] sm:$0xff]
      %v399 = vld [vmem:[%s270 + $0xc8] sm:$0xff]
      %v400 = vld [vmem:[%s270 + $0xd0] sm:$0xff]
      %v401 = vld [vmem:[%s270 + $0xd8] sm:$0xff]
      %v402 = vld [vmem:[%s270 + $0xe0] sm:$0xff]
      %v403 = vld [vmem:[%s270 + $0xe8] sm:$0xff]
      %v404 = vld [vmem:[%s270 + $0xf0] sm:$0xff]
      %v405 = vld [vmem:[%s270 + $0xf8] sm:$0xff]
      %v406 = vld [vmem:[%s270 + $0x100] sm:$0xff]
      %v407 = vld [vmem:[%s270 + $0x108] sm:$0xff]
      %v408 = vld [vmem:[%s270 + $0x110] sm:$0xff]
      %v409 = vld [vmem:[%s270 + $0x118] sm:$0xff]
      %v410 = vld [vmem:[%s270 + $0x120] sm:$0xff]
      %v411 = vld [vmem:[%s270 + $0x128] sm:$0xff]
      %v412 = vld [vmem:[%s270 + $0x130] sm:$0xff]
      %v413 = vld [vmem:[%s270 + $0x138] sm:$0xff]
      %v414 = vld [vmem:[%s270 + $0x140] sm:$0xff]
      %v415 = vld [vmem:[%s270 + $0x148] sm:$0xff]
      %v416 = vld [vmem:[%s270 + $0x150] sm:$0xff]
      %v417 = vld [vmem:[%s270 + $0x158] sm:$0xff]
      %v418 = vld [vmem:[%s270 + $0x160] sm:$0xff]
      %v419 = vld [vmem:[%s270 + $0x168] sm:$0xff]
      %v420 = vld [vmem:[%s270 + $0x170] sm:$0xff]
      %v421 = vld [vmem:[%s270 + $0x178] sm:$0xff]
      %v422 = vld [vmem:[%s270 + $0x180] sm:$0xff]
      %v423 = vld [vmem:[%s270 + $0x188] sm:$0xff]
      %v424 = vld [vmem:[%s270 + $0x190] sm:$0xff]
      %v425 = vld [vmem:[%s270 + $0x198] sm:$0xff]
      %v426 = vld [vmem:[%s270 + $0x1a0] sm:$0xff]
      %v427 = vld [vmem:[%s270 + $0x1a8] sm:$0xff]
      %v428 = vld [vmem:[%s270 + $0x1b0] sm:$0xff]
      %v429 = vld [vmem:[%s270 + $0x1b8] sm:$0xff]
      %v430 = vld [vmem:[%s270 + $0x1c0] sm:$0xff]
      %v431 = vld [vmem:[%s270 + $0x1c8] sm:$0xff]
      %v432 = vld [vmem:[%s270 + $0x1d0] sm:$0xff]
      %v433 = vld [vmem:[%s270 + $0x1d8] sm:$0xff]
      %v434 = vld [vmem:[%s270 + $0x1e0] sm:$0xff]
      %v435 = vld [vmem:[%s270 + $0x1e8] sm:$0xff]
      %v436 = vld [vmem:[%s270 + $0x1f0] sm:$0xff]
      %v437 = vld [vmem:[%s270 + $0x1f8] sm:$0xff]
      %v438 = vld [vmem:[%s280] sm:$0xf]
      %v439 = vld [vmem:[%s280 + $0x4] sm:$0xf]
      %v440 = vld [vmem:[%s280 + $0x8] sm:$0xf]
      %v441 = vld [vmem:[%s280 + $0xc] sm:$0xf]
      %v442 = vld [vmem:[%s280 + $0x10] sm:$0xf]
      %v443 = vld [vmem:[%s280 + $0x14] sm:$0xf]
      %v444 = vld [vmem:[%s280 + $0x18] sm:$0xf]
      %v445 = vld [vmem:[%s280 + $0x1c] sm:$0xf]
      %v446 = vld [vmem:[%s280 + $0x20] sm:$0xf]
      %v447 = vld [vmem:[%s280 + $0x24] sm:$0xf]
      %v448 = vld [vmem:[%s280 + $0x28] sm:$0xf]
      %v449 = vld [vmem:[%s280 + $0x2c] sm:$0xf]
      %v450 = vld [vmem:[%s280 + $0x30] sm:$0xf]
      %v451 = vld [vmem:[%s280 + $0x34] sm:$0xf]
      %v452 = vld [vmem:[%s280 + $0x38] sm:$0xf]
      %v453 = vld [vmem:[%s280 + $0x3c] sm:$0xf]
      %v454 = vld [vmem:[%s280 + $0x40] sm:$0xf]
      %v455 = vld [vmem:[%s280 + $0x44] sm:$0xf]
      %v456 = vld [vmem:[%s280 + $0x48] sm:$0xf]
      %v457 = vld [vmem:[%s280 + $0x4c] sm:$0xf]
      %v458 = vld [vmem:[%s280 + $0x50] sm:$0xf]
      %v459 = vld [vmem:[%s280 + $0x54] sm:$0xf]
      %v460 = vld [vmem:[%s280 + $0x58] sm:$0xf]
      %v461 = vld [vmem:[%s280 + $0x5c] sm:$0xf]
      %v462 = vld [vmem:[%s280 + $0x60] sm:$0xf]
      %v463 = vld [vmem:[%s280 + $0x64] sm:$0xf]
      %v464 = vld [vmem:[%s280 + $0x68] sm:$0xf]
      %v465 = vld [vmem:[%s280 + $0x6c] sm:$0xf]
      %v466 = vld [vmem:[%s280 + $0x70] sm:$0xf]
      %v467 = vld [vmem:[%s280 + $0x74] sm:$0xf]
      %v468 = vld [vmem:[%s280 + $0x78] sm:$0xf]
      %v469 = vld [vmem:[%s280 + $0x7c] sm:$0xf]
      %v470 = vld [vmem:[%s280 + $0x80] sm:$0xf]
      %v471 = vld [vmem:[%s280 + $0x84] sm:$0xf]
      %v472 = vld [vmem:[%s280 + $0x88] sm:$0xf]
      %v473 = vld [vmem:[%s280 + $0x8c] sm:$0xf]
      %v474 = vld [vmem:[%s280 + $0x90] sm:$0xf]
      %v475 = vld [vmem:[%s280 + $0x94] sm:$0xf]
      %v476 = vld [vmem:[%s280 + $0x98] sm:$0xf]
      %v477 = vld [vmem:[%s280 + $0x9c] sm:$0xf]
      %v478 = vld [vmem:[%s280 + $0xa0] sm:$0xf]
      %v479 = vld [vmem:[%s280 + $0xa4] sm:$0xf]
      %v480 = vld [vmem:[%s280 + $0xa8] sm:$0xf]
      %v481 = vld [vmem:[%s280 + $0xac] sm:$0xf]
      %v482 = vld [vmem:[%s280 + $0xb0] sm:$0xf]
      %v483 = vld [vmem:[%s280 + $0xb4] sm:$0xf]
      %v484 = vld [vmem:[%s280 + $0xb8] sm:$0xf]
      %v485 = vld [vmem:[%s280 + $0xbc] sm:$0xf]
      %v486 = vld [vmem:[%s280 + $0xc0] sm:$0xf]
      %v487 = vld [vmem:[%s280 + $0xc4] sm:$0xf]
      %v488 = vld [vmem:[%s280 + $0xc8] sm:$0xf]
      %v489 = vld [vmem:[%s280 + $0xcc] sm:$0xf]
      %v490 = vld [vmem:[%s280 + $0xd0] sm:$0xf]
      %v491 = vld [vmem:[%s280 + $0xd4] sm:$0xf]
      %v492 = vld [vmem:[%s280 + $0xd8] sm:$0xf]
      %v493 = vld [vmem:[%s280 + $0xdc] sm:$0xf]
      %v494 = vld [vmem:[%s280 + $0xe0] sm:$0xf]
      %v495 = vld [vmem:[%s280 + $0xe4] sm:$0xf]
      %v496 = vld [vmem:[%s280 + $0xe8] sm:$0xf]
      %v497 = vld [vmem:[%s280 + $0xec] sm:$0xf]
      %v498 = vld [vmem:[%s280 + $0xf0] sm:$0xf]
      %v499 = vld [vmem:[%s280 + $0xf4] sm:$0xf]
      %v500 = vld [vmem:[%s280 + $0xf8] sm:$0xf]
      %v501 = vld [vmem:[%s280 + $0xfc] sm:$0xf]
      %v566 = vunpack.c.l.b16 %v374
      %v567 = vunpack.c.h.b16 %v374
      %v568 = vunpack.c.l.b16 %v375
      %v569 = vunpack.c.h.b16 %v375
      %v570 = vunpack.c.l.b16 %v376
      %v571 = vunpack.c.h.b16 %v376
      %v572 = vunpack.c.l.b16 %v377
      %v573 = vunpack.c.h.b16 %v377
      %v574 = vunpack.c.l.b16 %v378
      %v575 = vunpack.c.h.b16 %v378
      %v576 = vunpack.c.l.b16 %v379
      %v577 = vunpack.c.h.b16 %v379
      %v578 = vunpack.c.l.b16 %v380
      %v579 = vunpack.c.h.b16 %v380
      %v580 = vunpack.c.l.b16 %v381
      %v581 = vunpack.c.h.b16 %v381
      %v582 = vunpack.c.l.b16 %v382
      %v583 = vunpack.c.h.b16 %v382
      %v584 = vunpack.c.l.b16 %v383
      %v585 = vunpack.c.h.b16 %v383
      %v586 = vunpack.c.l.b16 %v384
      %v587 = vunpack.c.h.b16 %v384
      %v588 = vunpack.c.l.b16 %v385
      %v589 = vunpack.c.h.b16 %v385
      %v590 = vunpack.c.l.b16 %v386
      %v591 = vunpack.c.h.b16 %v386
      %v592 = vunpack.c.l.b16 %v387
      %v593 = vunpack.c.h.b16 %v387
      %v594 = vunpack.c.l.b16 %v388
      %v595 = vunpack.c.h.b16 %v388
      %v596 = vunpack.c.l.b16 %v389
      %v597 = vunpack.c.h.b16 %v389
      %v598 = vunpack.c.l.b16 %v390
      %v599 = vunpack.c.h.b16 %v390
      %v600 = vunpack.c.l.b16 %v391
      %v601 = vunpack.c.h.b16 %v391
      %v602 = vunpack.c.l.b16 %v392
      %v603 = vunpack.c.h.b16 %v392
      %v604 = vunpack.c.l.b16 %v393
      %v605 = vunpack.c.h.b16 %v393
      %v606 = vunpack.c.l.b16 %v394
      %v607 = vunpack.c.h.b16 %v394
      %v608 = vunpack.c.l.b16 %v395
      %v609 = vunpack.c.h.b16 %v395
      %v610 = vunpack.c.l.b16 %v396
      %v611 = vunpack.c.h.b16 %v396
      %v612 = vunpack.c.l.b16 %v397
      %v613 = vunpack.c.h.b16 %v397
      %v614 = vunpack.c.l.b16 %v398
      %v615 = vunpack.c.h.b16 %v398
      %v616 = vunpack.c.l.b16 %v399
      %v617 = vunpack.c.h.b16 %v399
      %v618 = vunpack.c.l.b16 %v400
      %v619 = vunpack.c.h.b16 %v400
      %v620 = vunpack.c.l.b16 %v401
      %v621 = vunpack.c.h.b16 %v401
      %v622 = vunpack.c.l.b16 %v402
      %v623 = vunpack.c.h.b16 %v402
      %v624 = vunpack.c.l.b16 %v403
      %v625 = vunpack.c.h.b16 %v403
      %v626 = vunpack.c.l.b16 %v404
      %v627 = vunpack.c.h.b16 %v404
      %v628 = vunpack.c.l.b16 %v405
      %v629 = vunpack.c.h.b16 %v405
      %v630 = vunpack.c.l.b16 %v406
      %v631 = vunpack.c.h.b16 %v406
      %v632 = vunpack.c.l.b16 %v407
      %v633 = vunpack.c.h.b16 %v407
      %v634 = vunpack.c.l.b16 %v408
      %v635 = vunpack.c.h.b16 %v408
      %v636 = vunpack.c.l.b16 %v409
      %v637 = vunpack.c.h.b16 %v409
      %v638 = vunpack.c.l.b16 %v410
      %v639 = vunpack.c.h.b16 %v410
      %v640 = vunpack.c.l.b16 %v411
      %v641 = vunpack.c.h.b16 %v411
      %v642 = vunpack.c.l.b16 %v412
      %v643 = vunpack.c.h.b16 %v412
      %v644 = vunpack.c.l.b16 %v413
      %v645 = vunpack.c.h.b16 %v413
      %v646 = vunpack.c.l.b16 %v414
      %v647 = vunpack.c.h.b16 %v414
      %v648 = vunpack.c.l.b16 %v415
      %v649 = vunpack.c.h.b16 %v415
      %v650 = vunpack.c.l.b16 %v416
      %v651 = vunpack.c.h.b16 %v416
      %v652 = vunpack.c.l.b16 %v417
      %v653 = vunpack.c.h.b16 %v417
      %v654 = vunpack.c.l.b16 %v418
      %v655 = vunpack.c.h.b16 %v418
      %v656 = vunpack.c.l.b16 %v419
      %v657 = vunpack.c.h.b16 %v419
      %v658 = vunpack.c.l.b16 %v420
      %v659 = vunpack.c.h.b16 %v420
      %v660 = vunpack.c.l.b16 %v421
      %v661 = vunpack.c.h.b16 %v421
      %v662 = vunpack.c.l.b16 %v422
      %v663 = vunpack.c.h.b16 %v422
      %v664 = vunpack.c.l.b16 %v423
      %v665 = vunpack.c.h.b16 %v423
      %v666 = vunpack.c.l.b16 %v424
      %v667 = vunpack.c.h.b16 %v424
      %v668 = vunpack.c.l.b16 %v425
      %v669 = vunpack.c.h.b16 %v425
      %v670 = vunpack.c.l.b16 %v426
      %v671 = vunpack.c.h.b16 %v426
      %v672 = vunpack.c.l.b16 %v427
      %v673 = vunpack.c.h.b16 %v427
      %v674 = vunpack.c.l.b16 %v428
      %v675 = vunpack.c.h.b16 %v428
      %v676 = vunpack.c.l.b16 %v429
      %v677 = vunpack.c.h.b16 %v429
      %v678 = vunpack.c.l.b16 %v430
      %v679 = vunpack.c.h.b16 %v430
      %v680 = vunpack.c.l.b16 %v431
      %v681 = vunpack.c.h.b16 %v431
      %v682 = vunpack.c.l.b16 %v432
      %v683 = vunpack.c.h.b16 %v432
      %v684 = vunpack.c.l.b16 %v433
      %v685 = vunpack.c.h.b16 %v433
      %v686 = vunpack.c.l.b16 %v434
      %v687 = vunpack.c.h.b16 %v434
      %v688 = vunpack.c.l.b16 %v435
      %v689 = vunpack.c.h.b16 %v435
      %v690 = vunpack.c.l.b16 %v436
      %v691 = vunpack.c.h.b16 %v436
      %v692 = vunpack.c.l.b16 %v437
      %v693 = vunpack.c.h.b16 %v437
      %v694 = vpack.c.b16 %v570, %v566
      %v695 = vpack.c.b16 %v571, %v567
      %v696 = vpack.c.b16 %v572, %v568
      %v697 = vpack.c.b16 %v573, %v569
      %v698 = vpack.c.b16 %v578, %v574
      %v699 = vpack.c.b16 %v579, %v575
      %v700 = vpack.c.b16 %v580, %v576
      %v701 = vpack.c.b16 %v581, %v577
      %v702 = vpack.c.b16 %v586, %v582
      %v703 = vpack.c.b16 %v587, %v583
      %v704 = vpack.c.b16 %v588, %v584
      %v705 = vpack.c.b16 %v589, %v585
      %v706 = vpack.c.b16 %v594, %v590
      %v707 = vpack.c.b16 %v595, %v591
      %v708 = vpack.c.b16 %v596, %v592
      %v709 = vpack.c.b16 %v597, %v593
      %v710 = vpack.c.b16 %v602, %v598
      %v711 = vpack.c.b16 %v603, %v599
      %v712 = vpack.c.b16 %v604, %v600
      %v713 = vpack.c.b16 %v605, %v601
      %v714 = vpack.c.b16 %v610, %v606
      %v715 = vpack.c.b16 %v611, %v607
      %v716 = vpack.c.b16 %v612, %v608
      %v717 = vpack.c.b16 %v613, %v609
      %v718 = vpack.c.b16 %v618, %v614
      %v719 = vpack.c.b16 %v619, %v615
      %v720 = vpack.c.b16 %v620, %v616
      %v721 = vpack.c.b16 %v621, %v617
      %v722 = vpack.c.b16 %v626, %v622
      %v723 = vpack.c.b16 %v627, %v623
      %v724 = vpack.c.b16 %v628, %v624
      %v725 = vpack.c.b16 %v629, %v625
      %v726 = vpack.c.b16 %v634, %v630
      %v727 = vpack.c.b16 %v635, %v631
      %v728 = vpack.c.b16 %v636, %v632
      %v729 = vpack.c.b16 %v637, %v633
      %v730 = vpack.c.b16 %v642, %v638
      %v731 = vpack.c.b16 %v643, %v639
      %v732 = vpack.c.b16 %v644, %v640
      %v733 = vpack.c.b16 %v645, %v641
      %v734 = vpack.c.b16 %v650, %v646
      %v735 = vpack.c.b16 %v651, %v647
      %v736 = vpack.c.b16 %v652, %v648
      %v737 = vpack.c.b16 %v653, %v649
      %v738 = vpack.c.b16 %v658, %v654
      %v739 = vpack.c.b16 %v659, %v655
      %v740 = vpack.c.b16 %v660, %v656
      %v741 = vpack.c.b16 %v661, %v657
      %v742 = vpack.c.b16 %v666, %v662
      %v743 = vpack.c.b16 %v667, %v663
      %v744 = vpack.c.b16 %v668, %v664
      %v745 = vpack.c.b16 %v669, %v665
      %v746 = vpack.c.b16 %v674, %v670
      %v747 = vpack.c.b16 %v675, %v671
      %v748 = vpack.c.b16 %v676, %v672
      %v749 = vpack.c.b16 %v677, %v673
      %v750 = vpack.c.b16 %v682, %v678
      %v751 = vpack.c.b16 %v683, %v679
      %v752 = vpack.c.b16 %v684, %v680
      %v753 = vpack.c.b16 %v685, %v681
      %v754 = vpack.c.b16 %v690, %v686
      %v755 = vpack.c.b16 %v691, %v687
      %v756 = vpack.c.b16 %v692, %v688
      %v757 = vpack.c.b16 %v693, %v689
      %v886 = vunpack.c.l.b16 %v438
      %v887 = vunpack.c.l.b16 %v439
      %v888 = vunpack.c.l.b16 %v440
      %v889 = vunpack.c.l.b16 %v441
      %v890 = vunpack.c.l.b16 %v442
      %v891 = vunpack.c.l.b16 %v443
      %v892 = vunpack.c.l.b16 %v444
      %v893 = vunpack.c.l.b16 %v445
      %v894 = vunpack.c.l.b16 %v446
      %v895 = vunpack.c.l.b16 %v447
      %v896 = vunpack.c.l.b16 %v448
      %v897 = vunpack.c.l.b16 %v449
      %v898 = vunpack.c.l.b16 %v450
      %v899 = vunpack.c.l.b16 %v451
      %v900 = vunpack.c.l.b16 %v452
      %v901 = vunpack.c.l.b16 %v453
      %v902 = vunpack.c.l.b16 %v454
      %v903 = vunpack.c.l.b16 %v455
      %v904 = vunpack.c.l.b16 %v456
      %v905 = vunpack.c.l.b16 %v457
      %v906 = vunpack.c.l.b16 %v458
      %v907 = vunpack.c.l.b16 %v459
      %v908 = vunpack.c.l.b16 %v460
      %v909 = vunpack.c.l.b16 %v461
      %v910 = vunpack.c.l.b16 %v462
      %v911 = vunpack.c.l.b16 %v463
      %v912 = vunpack.c.l.b16 %v464
      %v913 = vunpack.c.l.b16 %v465
      %v914 = vunpack.c.l.b16 %v466
      %v915 = vunpack.c.l.b16 %v467
      %v916 = vunpack.c.l.b16 %v468
      %v917 = vunpack.c.l.b16 %v469
      %v918 = vunpack.c.l.b16 %v470
      %v919 = vunpack.c.l.b16 %v471
      %v920 = vunpack.c.l.b16 %v472
      %v921 = vunpack.c.l.b16 %v473
      %v922 = vunpack.c.l.b16 %v474
      %v923 = vunpack.c.l.b16 %v475
      %v924 = vunpack.c.l.b16 %v476
      %v925 = vunpack.c.l.b16 %v477
      %v926 = vunpack.c.l.b16 %v478
      %v927 = vunpack.c.l.b16 %v479
      %v928 = vunpack.c.l.b16 %v480
      %v929 = vunpack.c.l.b16 %v481
      %v930 = vunpack.c.l.b16 %v482
      %v931 = vunpack.c.l.b16 %v483
      %v932 = vunpack.c.l.b16 %v484
      %v933 = vunpack.c.l.b16 %v485
      %v934 = vunpack.c.l.b16 %v486
      %v935 = vunpack.c.l.b16 %v487
      %v936 = vunpack.c.l.b16 %v488
      %v937 = vunpack.c.l.b16 %v489
      %v938 = vunpack.c.l.b16 %v490
      %v939 = vunpack.c.l.b16 %v491
      %v940 = vunpack.c.l.b16 %v492
      %v941 = vunpack.c.l.b16 %v493
      %v942 = vunpack.c.l.b16 %v494
      %v943 = vunpack.c.l.b16 %v495
      %v944 = vunpack.c.l.b16 %v496
      %v945 = vunpack.c.l.b16 %v497
      %v946 = vunpack.c.l.b16 %v498
      %v947 = vunpack.c.l.b16 %v499
      %v948 = vunpack.c.l.b16 %v500
      %v949 = vunpack.c.l.b16 %v501
      %v950 = vpack.c.b16 %v887, %v886
      %v951 = vpack.c.b16 %v889, %v888
      %v952 = vpack.c.b16 %v891, %v890
      %v953 = vpack.c.b16 %v893, %v892
      %v954 = vpack.c.b16 %v895, %v894
      %v955 = vpack.c.b16 %v897, %v896
      %v956 = vpack.c.b16 %v899, %v898
      %v957 = vpack.c.b16 %v901, %v900
      %v958 = vpack.c.b16 %v903, %v902
      %v959 = vpack.c.b16 %v905, %v904
      %v960 = vpack.c.b16 %v907, %v906
      %v961 = vpack.c.b16 %v909, %v908
      %v962 = vpack.c.b16 %v911, %v910
      %v963 = vpack.c.b16 %v913, %v912
      %v964 = vpack.c.b16 %v915, %v914
      %v965 = vpack.c.b16 %v917, %v916
      %v966 = vpack.c.b16 %v919, %v918
      %v967 = vpack.c.b16 %v921, %v920
      %v968 = vpack.c.b16 %v923, %v922
      %v969 = vpack.c.b16 %v925, %v924
      %v970 = vpack.c.b16 %v927, %v926
      %v971 = vpack.c.b16 %v929, %v928
      %v972 = vpack.c.b16 %v931, %v930
      %v973 = vpack.c.b16 %v933, %v932
      %v974 = vpack.c.b16 %v935, %v934
      %v975 = vpack.c.b16 %v937, %v936
      %v976 = vpack.c.b16 %v939, %v938
      %v977 = vpack.c.b16 %v941, %v940
      %v978 = vpack.c.b16 %v943, %v942
      %v979 = vpack.c.b16 %v945, %v944
      %v980 = vpack.c.b16 %v947, %v946
      %v981 = vpack.c.b16 %v949, %v948
      %1014 = vmatprep.subr.bf16.mxu0 0
      %1015 = vmatpush1.bf16.msra.mxu0 %v950
      %1016 = vmatprep.subr.bf16.mxu0 0
      %1017 = vmatpush1.bf16.msra.mxu0 %v951
      %1018 = vmatprep.subr.bf16.mxu0 0
      %1019 = vmatpush1.bf16.msra.mxu0 %v952
      %1020 = vmatprep.subr.bf16.mxu0 0
      %1021 = vmatpush1.bf16.msra.mxu0 %v953
      %1022 = vmatprep.subr.bf16.mxu0 0
      %1023 = vmatpush1.bf16.msra.mxu0 %v954
      %1024 = vmatprep.subr.bf16.mxu0 0
      %1025 = vmatpush1.bf16.msra.mxu0 %v955
      %1026 = vmatprep.subr.bf16.mxu0 0
      %1027 = vmatpush1.bf16.msra.mxu0 %v956
      %1028 = vmatprep.subr.bf16.mxu0 0
      %1029 = vmatpush1.bf16.msra.mxu0 %v957
      %1030 = vmatprep.subr.bf16.mxu0 0
      %1031 = vmatpush1.bf16.msra.mxu0 %v958
      %1032 = vmatprep.subr.bf16.mxu0 0
      %1033 = vmatpush1.bf16.msra.mxu0 %v959
      %1034 = vmatprep.subr.bf16.mxu0 0
      %1035 = vmatpush1.bf16.msra.mxu0 %v960
      %1036 = vmatprep.subr.bf16.mxu0 0
      %1037 = vmatpush1.bf16.msra.mxu0 %v961
      %1038 = vmatprep.subr.bf16.mxu0 0
      %1039 = vmatpush1.bf16.msra.mxu0 %v962
      %1040 = vmatprep.subr.bf16.mxu0 0
      %1041 = vmatpush1.bf16.msra.mxu0 %v963
      %1042 = vmatprep.subr.bf16.mxu0 0
      %1043 = vmatpush1.bf16.msra.mxu0 %v964
      %1044 = vmatprep.subr.bf16.mxu0 0
      %1045 = vmatpush1.bf16.msra.mxu0 %v965
      %1046 = vmatprep.mubr.bf16.mxu0 %v695
      %1047 = vmatmul.mubr.bf16.gmra.mrb[0].mxu0 %v694
      %v1048 = vpop.f32.mrb[0].mxu0
      %v1049 = vadd.f32 0.0, %v1048
      %v1050 = vpop.f32.mrb[0].mxu0
      %v1051 = vpop.f32.mrb[0].mxu0
      %v1052 = vadd.f32 0.0, %v1051
      %v1053 = vpop.f32.mrb[0].mxu0
      %1054 = vmatprep.mubr.bf16.mxu0 %v699
      %1055 = vmatmul.mubr.bf16.gmra.mrb[0].mxu0 %v698
      %v1056 = vpop.f32.mrb[0].mxu0
      %v1057 = vadd.f32 0.0, %v1056
      %v1058 = vpop.f32.mrb[0].mxu0
      %v1059 = vpop.f32.mrb[0].mxu0
      %v1060 = vadd.f32 0.0, %v1059
      %v1061 = vpop.f32.mrb[0].mxu0
      %1062 = vmatprep.mubr.bf16.mxu0 %v703
      %1063 = vmatmul.mubr.bf16.gmra.mrb[0].mxu0 %v702
      %v1064 = vpop.f32.mrb[0].mxu0
      %v1065 = vadd.f32 0.0, %v1064
      %v1066 = vpop.f32.mrb[0].mxu0
      %v1067 = vpop.f32.mrb[0].mxu0
      %v1068 = vadd.f32 0.0, %v1067
      %v1069 = vpop.f32.mrb[0].mxu0
      %1070 = vmatprep.mubr.bf16.mxu0 %v707
      %1071 = vmatmul.mubr.bf16.gmra.mrb[0].mxu0 %v706
      %v1072 = vpop.f32.mrb[0].mxu0
      %v1073 = vadd.f32 0.0, %v1072
      %v1074 = vpop.f32.mrb[0].mxu0
      %v1075 = vpop.f32.mrb[0].mxu0
      %v1076 = vadd.f32 0.0, %v1075
      %v1077 = vpop.f32.mrb[0].mxu0
      %1078 = vmatprep.mubr.bf16.mxu0 %v711
      %1079 = vmatmul.mubr.bf16.gmra.mrb[0].mxu0 %v710
      %v1080 = vpop.f32.mrb[0].mxu0
      %v1081 = vadd.f32 0.0, %v1080
      %v1082 = vpop.f32.mrb[0].mxu0
      %v1083 = vpop.f32.mrb[0].mxu0
      %v1084 = vadd.f32 0.0, %v1083
      %v1085 = vpop.f32.mrb[0].mxu0
      %1086 = vmatprep.mubr.bf16.mxu0 %v715
      %1087 = vmatmul.mubr.bf16.gmra.mrb[0].mxu0 %v714
      %v1088 = vpop.f32.mrb[0].mxu0
      %v1089 = vadd.f32 0.0, %v1088
      %v1090 = vpop.f32.mrb[0].mxu0
      %v1091 = vpop.f32.mrb[0].mxu0
      %v1092 = vadd.f32 0.0, %v1091
      %v1093 = vpop.f32.mrb[0].mxu0
      %1094 = vmatprep.mubr.bf16.mxu0 %v719
      %1095 = vmatmul.mubr.bf16.gmra.mrb[0].mxu0 %v718
      %v1096 = vpop.f32.mrb[0].mxu0
      %v1097 = vadd.f32 0.0, %v1096
      %v1098 = vpop.f32.mrb[0].mxu0
      %v1099 = vpop.f32.mrb[0].mxu0
      %v1100 = vadd.f32 0.0, %v1099
      %v1101 = vpop.f32.mrb[0].mxu0
      %1102 = vmatprep.mubr.bf16.mxu0 %v723
      %1103 = vmatmul.mubr.bf16.gmra.mrb[0].mxu0 %v722
      %v1104 = vpop.f32.mrb[0].mxu0
      %v1105 = vadd.f32 0.0, %v1104
      %v1106 = vpop.f32.mrb[0].mxu0
      %v1107 = vpop.f32.mrb[0].mxu0
      %v1108 = vadd.f32 0.0, %v1107
      %v1109 = vpop.f32.mrb[0].mxu0
      %1110 = vmatprep.mubr.bf16.mxu0 %v727
      %1111 = vmatmul.mubr.bf16.gmra.mrb[0].mxu0 %v726
      %v1112 = vpop.f32.mrb[0].mxu0
      %v1113 = vadd.f32 0.0, %v1112
      %v1114 = vpop.f32.mrb[0].mxu0
      %v1115 = vpop.f32.mrb[0].mxu0
      %v1116 = vadd.f32 0.0, %v1115
      %v1117 = vpop.f32.mrb[0].mxu0
      %1118 = vmatprep.mubr.bf16.mxu0 %v731
      %1119 = vmatmul.mubr.bf16.gmra.mrb[0].mxu0 %v730
      %v1120 = vpop.f32.mrb[0].mxu0
      %v1121 = vadd.f32 0.0, %v1120
      %v1122 = vpop.f32.mrb[0].mxu0
      %v1123 = vpop.f32.mrb[0].mxu0
      %v1124 = vadd.f32 0.0, %v1123
      %v1125 = vpop.f32.mrb[0].mxu0
      %1126 = vmatprep.mubr.bf16.mxu0 %v735
      %1127 = vmatmul.mubr.bf16.gmra.mrb[0].mxu0 %v734
      %v1128 = vpop.f32.mrb[0].mxu0
      %v1129 = vadd.f32 0.0, %v1128
      %v1130 = vpop.f32.mrb[0].mxu0
      %v1131 = vpop.f32.mrb[0].mxu0
      %v1132 = vadd.f32 0.0, %v1131
      %v1133 = vpop.f32.mrb[0].mxu0
      %1134 = vmatprep.mubr.bf16.mxu0 %v739
      %1135 = vmatmul.mubr.bf16.gmra.mrb[0].mxu0 %v738
      %v1136 = vpop.f32.mrb[0].mxu0
      %v1137 = vadd.f32 0.0, %v1136
      %v1138 = vpop.f32.mrb[0].mxu0
      %v1139 = vpop.f32.mrb[0].mxu0
      %v1140 = vadd.f32 0.0, %v1139
      %v1141 = vpop.f32.mrb[0].mxu0
      %1142 = vmatprep.mubr.bf16.mxu0 %v743
      %1143 = vmatmul.mubr.bf16.gmra.mrb[0].mxu0 %v742
      %v1144 = vpop.f32.mrb[0].mxu0
      %v1145 = vadd.f32 0.0, %v1144
      %v1146 = vpop.f32.mrb[0].mxu0
      %v1147 = vpop.f32.mrb[0].mxu0
      %v1148 = vadd.f32 0.0, %v1147
      %v1149 = vpop.f32.mrb[0].mxu0
      %1150 = vmatprep.mubr.bf16.mxu0 %v747
      %1151 = vmatmul.mubr.bf16.gmra.mrb[0].mxu0 %v746
      %v1152 = vpop.f32.mrb[0].mxu0
      %v1153 = vadd.f32 0.0, %v1152
      %v1154 = vpop.f32.mrb[0].mxu0
      %v1155 = vpop.f32.mrb[0].mxu0
      %v1156 = vadd.f32 0.0, %v1155
      %v1157 = vpop.f32.mrb[0].mxu0
      %1158 = vmatprep.mubr.bf16.mxu0 %v751
      %1159 = vmatmul.mubr.bf16.gmra.mrb[0].mxu0 %v750
      %v1160 = vpop.f32.mrb[0].mxu0
      %v1161 = vadd.f32 0.0, %v1160
      %v1162 = vpop.f32.mrb[0].mxu0
      %v1163 = vpop.f32.mrb[0].mxu0
      %v1164 = vadd.f32 0.0, %v1163
      %v1165 = vpop.f32.mrb[0].mxu0
      %1166 = vmatprep.mubr.bf16.mxu0 %v755
      %1167 = vmatmul.mubr.bf16.gmra.mrb[0].mxu0 %v754
      %v1168 = vpop.f32.mrb[0].mxu0
      %v1169 = vadd.f32 0.0, %v1168
      %v1170 = vpop.f32.mrb[0].mxu0
      %v1171 = vpop.f32.mrb[0].mxu0
      %v1172 = vadd.f32 0.0, %v1171
      %v1173 = vpop.f32.mrb[0].mxu0
      %1174 = vdwg.mxu0
      %1175 = vmatprep.subr.bf16.mxu0 0
      %1176 = vmatpush1.bf16.msra.mxu0 %v966
      %1177 = vmatprep.subr.bf16.mxu0 0
      %1178 = vmatpush1.bf16.msra.mxu0 %v967
      %1179 = vmatprep.subr.bf16.mxu0 0
      %1180 = vmatpush1.bf16.msra.mxu0 %v968
      %1181 = vmatprep.subr.bf16.mxu0 0
      %1182 = vmatpush1.bf16.msra.mxu0 %v969
      %1183 = vmatprep.subr.bf16.mxu0 0
      %1184 = vmatpush1.bf16.msra.mxu0 %v970
      %1185 = vmatprep.subr.bf16.mxu0 0
      %1186 = vmatpush1.bf16.msra.mxu0 %v971
      %1187 = vmatprep.subr.bf16.mxu0 0
      %1188 = vmatpush1.bf16.msra.mxu0 %v972
      %1189 = vmatprep.subr.bf16.mxu0 0
      %1190 = vmatpush1.bf16.msra.mxu0 %v973
      %1191 = vmatprep.subr.bf16.mxu0 0
      %1192 = vmatpush1.bf16.msra.mxu0 %v974
      %1193 = vmatprep.subr.bf16.mxu0 0
      %1194 = vmatpush1.bf16.msra.mxu0 %v975
      %1195 = vmatprep.subr.bf16.mxu0 0
      %1196 = vmatpush1.bf16.msra.mxu0 %v976
      %1197 = vmatprep.subr.bf16.mxu0 0
      %1198 = vmatpush1.bf16.msra.mxu0 %v977
      %1199 = vmatprep.subr.bf16.mxu0 0
      %1200 = vmatpush1.bf16.msra.mxu0 %v978
      %1201 = vmatprep.subr.bf16.mxu0 0
      %1202 = vmatpush1.bf16.msra.mxu0 %v979
      %1203 = vmatprep.subr.bf16.mxu0 0
      %1204 = vmatpush1.bf16.msra.mxu0 %v980
      %1205 = vmatprep.subr.bf16.mxu0 0
      %1206 = vmatpush1.bf16.msra.mxu0 %v981
      %1207 = vmatprep.mubr.bf16.mxu0 %v697
      %1208 = vmatmul.mubr.bf16.gmra.mrb[0].mxu0 %v696
      %v1209 = vpop.f32.mrb[0].mxu0
      %v1210 = vadd.f32 %v1049, %v1209
      %v1211 = vpop.f32.mrb[0].mxu0
      %v1212 = vpop.f32.mrb[0].mxu0
      %v1213 = vadd.f32 %v1052, %v1212
      %v1214 = vpop.f32.mrb[0].mxu0
      %1215 = vmatprep.mubr.bf16.mxu0 %v701
      %1216 = vmatmul.mubr.bf16.gmra.mrb[0].mxu0 %v700
      %v1217 = vpop.f32.mrb[0].mxu0
      %v1218 = vadd.f32 %v1057, %v1217
      %v1219 = vpop.f32.mrb[0].mxu0
      %v1220 = vpop.f32.mrb[0].mxu0
      %v1221 = vadd.f32 %v1060, %v1220
      %v1222 = vpop.f32.mrb[0].mxu0
      %1223 = vmatprep.mubr.bf16.mxu0 %v705
      %1224 = vmatmul.mubr.bf16.gmra.mrb[0].mxu0 %v704
      %v1225 = vpop.f32.mrb[0].mxu0
      %v1226 = vadd.f32 %v1065, %v1225
      %v1227 = vpop.f32.mrb[0].mxu0
      %v1228 = vpop.f32.mrb[0].mxu0
      %v1229 = vadd.f32 %v1068, %v1228
      %v1230 = vpop.f32.mrb[0].mxu0
      %1231 = vmatprep.mubr.bf16.mxu0 %v709
      %1232 = vmatmul.mubr.bf16.gmra.mrb[0].mxu0 %v708
      %v1233 = vpop.f32.mrb[0].mxu0
      %v1234 = vadd.f32 %v1073, %v1233
      %v1235 = vpop.f32.mrb[0].mxu0
      %v1236 = vpop.f32.mrb[0].mxu0
      %v1237 = vadd.f32 %v1076, %v1236
      %v1238 = vpop.f32.mrb[0].mxu0
      %1239 = vmatprep.mubr.bf16.mxu0 %v713
      %1240 = vmatmul.mubr.bf16.gmra.mrb[0].mxu0 %v712
      %v1241 = vpop.f32.mrb[0].mxu0
      %v1242 = vadd.f32 %v1081, %v1241
      %v1243 = vpop.f32.mrb[0].mxu0
      %v1244 = vpop.f32.mrb[0].mxu0
      %v1245 = vadd.f32 %v1084, %v1244
      %v1246 = vpop.f32.mrb[0].mxu0
      %1247 = vmatprep.mubr.bf16.mxu0 %v717
      %1248 = vmatmul.mubr.bf16.gmra.mrb[0].mxu0 %v716
      %v1249 = vpop.f32.mrb[0].mxu0
      %v1250 = vadd.f32 %v1089, %v1249
      %v1251 = vpop.f32.mrb[0].mxu0
      %v1252 = vpop.f32.mrb[0].mxu0
      %v1253 = vadd.f32 %v1092, %v1252
      %v1254 = vpop.f32.mrb[0].mxu0
      %1255 = vmatprep.mubr.bf16.mxu0 %v721
      %1256 = vmatmul.mubr.bf16.gmra.mrb[0].mxu0 %v720
      %v1257 = vpop.f32.mrb[0].mxu0
      %v1258 = vadd.f32 %v1097, %v1257
      %v1259 = vpop.f32.mrb[0].mxu0
      %v1260 = vpop.f32.mrb[0].mxu0
      %v1261 = vadd.f32 %v1100, %v1260
      %v1262 = vpop.f32.mrb[0].mxu0
      %1263 = vmatprep.mubr.bf16.mxu0 %v725
      %1264 = vmatmul.mubr.bf16.gmra.mrb[0].mxu0 %v724
      %v1265 = vpop.f32.mrb[0].mxu0
      %v1266 = vadd.f32 %v1105, %v1265
      %v1267 = vpop.f32.mrb[0].mxu0
      %v1268 = vpop.f32.mrb[0].mxu0
      %v1269 = vadd.f32 %v1108, %v1268
      %v1270 = vpop.f32.mrb[0].mxu0
      %1271 = vmatprep.mubr.bf16.mxu0 %v729
      %1272 = vmatmul.mubr.bf16.gmra.mrb[0].mxu0 %v728
      %v1273 = vpop.f32.mrb[0].mxu0
      %v1274 = vadd.f32 %v1113, %v1273
      %v1275 = vpop.f32.mrb[0].mxu0
      %v1276 = vpop.f32.mrb[0].mxu0
      %v1277 = vadd.f32 %v1116, %v1276
      %v1278 = vpop.f32.mrb[0].mxu0
      %1279 = vmatprep.mubr.bf16.mxu0 %v733
      %1280 = vmatmul.mubr.bf16.gmra.mrb[0].mxu0 %v732
      %v1281 = vpop.f32.mrb[0].mxu0
      %v1282 = vadd.f32 %v1121, %v1281
      %v1283 = vpop.f32.mrb[0].mxu0
      %v1284 = vpop.f32.mrb[0].mxu0
      %v1285 = vadd.f32 %v1124, %v1284
      %v1286 = vpop.f32.mrb[0].mxu0
      %1287 = vmatprep.mubr.bf16.mxu0 %v737
      %1288 = vmatmul.mubr.bf16.gmra.mrb[0].mxu0 %v736
      %v1289 = vpop.f32.mrb[0].mxu0
      %v1290 = vadd.f32 %v1129, %v1289
      %v1291 = vpop.f32.mrb[0].mxu0
      %v1292 = vpop.f32.mrb[0].mxu0
      %v1293 = vadd.f32 %v1132, %v1292
      %v1294 = vpop.f32.mrb[0].mxu0
      %1295 = vmatprep.mubr.bf16.mxu0 %v741
      %1296 = vmatmul.mubr.bf16.gmra.mrb[0].mxu0 %v740
      %v1297 = vpop.f32.mrb[0].mxu0
      %v1298 = vadd.f32 %v1137, %v1297
      %v1299 = vpop.f32.mrb[0].mxu0
      %v1300 = vpop.f32.mrb[0].mxu0
      %v1301 = vadd.f32 %v1140, %v1300
      %v1302 = vpop.f32.mrb[0].mxu0
      %1303 = vmatprep.mubr.bf16.mxu0 %v745
      %1304 = vmatmul.mubr.bf16.gmra.mrb[0].mxu0 %v744
      %v1305 = vpop.f32.mrb[0].mxu0
      %v1306 = vadd.f32 %v1145, %v1305
      %v1307 = vpop.f32.mrb[0].mxu0
      %v1308 = vpop.f32.mrb[0].mxu0
      %v1309 = vadd.f32 %v1148, %v1308
      %v1310 = vpop.f32.mrb[0].mxu0
      %1311 = vmatprep.mubr.bf16.mxu0 %v749
      %1312 = vmatmul.mubr.bf16.gmra.mrb[0].mxu0 %v748
      %v1313 = vpop.f32.mrb[0].mxu0
      %v1314 = vadd.f32 %v1153, %v1313
      %v1315 = vpop.f32.mrb[0].mxu0
      %v1316 = vpop.f32.mrb[0].mxu0
      %v1317 = vadd.f32 %v1156, %v1316
      %v1318 = vpop.f32.mrb[0].mxu0
      %1319 = vmatprep.mubr.bf16.mxu0 %v753
      %1320 = vmatmul.mubr.bf16.gmra.mrb[0].mxu0 %v752
      %v1321 = vpop.f32.mrb[0].mxu0
      %v1322 = vadd.f32 %v1161, %v1321
      %v1323 = vpop.f32.mrb[0].mxu0
      %v1324 = vpop.f32.mrb[0].mxu0
      %v1325 = vadd.f32 %v1164, %v1324
      %v1326 = vpop.f32.mrb[0].mxu0
      %1327 = vmatprep.mubr.bf16.mxu0 %v757
      %1328 = vmatmul.mubr.bf16.gmra.mrb[0].mxu0 %v756
      %v1329 = vpop.f32.mrb[0].mxu0
      %v1330 = vadd.f32 %v1169, %v1329
      %v1331 = vpop.f32.mrb[0].mxu0
      %v1332 = vpop.f32.mrb[0].mxu0
      %v1333 = vadd.f32 %v1172, %v1332
      %v1334 = vpop.f32.mrb[0].mxu0
      %1335 = vdwg.mxu0
      %v1336 = vadd.f32 %v342, %v1210
      %v1337 = vadd.f32 %v343, %v1213
      %v1338 = vadd.f32 %v344, %v1218
      %v1339 = vadd.f32 %v345, %v1221
      %v1340 = vadd.f32 %v346, %v1226
      %v1341 = vadd.f32 %v347, %v1229
      %v1342 = vadd.f32 %v348, %v1234
      %v1343 = vadd.f32 %v349, %v1237
      %v1344 = vadd.f32 %v350, %v1242
      %v1345 = vadd.f32 %v351, %v1245
      %v1346 = vadd.f32 %v352, %v1250
      %v1347 = vadd.f32 %v353, %v1253
      %v1348 = vadd.f32 %v354, %v1258
      %v1349 = vadd.f32 %v355, %v1261
      %v1350 = vadd.f32 %v356, %v1266
      %v1351 = vadd.f32 %v357, %v1269
      %v1352 = vadd.f32 %v358, %v1274
      %v1353 = vadd.f32 %v359, %v1277
      %v1354 = vadd.f32 %v360, %v1282
      %v1355 = vadd.f32 %v361, %v1285
      %v1356 = vadd.f32 %v362, %v1290
      %v1357 = vadd.f32 %v363, %v1293
      %v1358 = vadd.f32 %v364, %v1298
      %v1359 = vadd.f32 %v365, %v1301
      %v1360 = vadd.f32 %v366, %v1306
      %v1361 = vadd.f32 %v367, %v1309
      %v1362 = vadd.f32 %v368, %v1314
      %v1363 = vadd.f32 %v369, %v1317
      %v1364 = vadd.f32 %v370, %v1322
      %v1365 = vadd.f32 %v371, %v1325
      %v1366 = vadd.f32 %v372, %v1330
      %v1367 = vadd.f32 %v373, %v1333
      %1368 = vst [vmem:[#allocation2] sm:$0xff] %v1336
      %1369 = vst [vmem:[#allocation2 + $0x8] sm:$0xff] %v1337
      %1370 = vst [vmem:[#allocation2 + $0x10] sm:$0xff] %v1338
      %1371 = vst [vmem:[#allocation2 + $0x18] sm:$0xff] %v1339
      %1372 = vst [vmem:[#allocation2 + $0x20] sm:$0xff] %v1340
      %1373 = vst [vmem:[#allocation2 + $0x28] sm:$0xff] %v1341
      %1374 = vst [vmem:[#allocation2 + $0x30] sm:$0xff] %v1342
      %1375 = vst [vmem:[#allocation2 + $0x38] sm:$0xff] %v1343
      %1376 = vst [vmem:[#allocation2 + $0x40] sm:$0xff] %v1344
      %1377 = vst [vmem:[#allocation2 + $0x48] sm:$0xff] %v1345
      %1378 = vst [vmem:[#allocation2 + $0x50] sm:$0xff] %v1346
      %1379 = vst [vmem:[#allocation2 + $0x58] sm:$0xff] %v1347
      %1380 = vst [vmem:[#allocation2 + $0x60] sm:$0xff] %v1348
      %1381 = vst [vmem:[#allocation2 + $0x68] sm:$0xff] %v1349
      %1382 = vst [vmem:[#allocation2 + $0x70] sm:$0xff] %v1350
      %1383 = vst [vmem:[#allocation2 + $0x78] sm:$0xff] %v1351
      %1384 = vst [vmem:[#allocation2 + $0x80] sm:$0xff] %v1352
      %1385 = vst [vmem:[#allocation2 + $0x88] sm:$0xff] %v1353
      %1386 = vst [vmem:[#allocation2 + $0x90] sm:$0xff] %v1354
      %1387 = vst [vmem:[#allocation2 + $0x98] sm:$0xff] %v1355
      %1388 = vst [vmem:[#allocation2 + $0xa0] sm:$0xff] %v1356
      %1389 = vst [vmem:[#allocation2 + $0xa8] sm:$0xff] %v1357
      %1390 = vst [vmem:[#allocation2 + $0xb0] sm:$0xff] %v1358
      %1391 = vst [vmem:[#allocation2 + $0xb8] sm:$0xff] %v1359
      %1392 = vst [vmem:[#allocation2 + $0xc0] sm:$0xff] %v1360
      %1393 = vst [vmem:[#allocation2 + $0xc8] sm:$0xff] %v1361
      %1394 = vst [vmem:[#allocation2 + $0xd0] sm:$0xff] %v1362
      %1395 = vst [vmem:[#allocation2 + $0xd8] sm:$0xff] %v1363
      %1396 = vst [vmem:[#allocation2 + $0xe0] sm:$0xff] %v1364
      %1397 = vst [vmem:[#allocation2 + $0xe8] sm:$0xff] %v1365
      %1398 = vst [vmem:[#allocation2 + $0xf0] sm:$0xff] %v1366
      %1399 = vst [vmem:[#allocation2 + $0xf8] sm:$0xff] %v1367
      // Predicated region
      $region37: #{res_inception_block_v1.1} parent=31 // pred_check
        %p1400 = pneg %p299
      $region38: #{res_inception_block_v1.1} parent=31 // pred_check_branch
        %1402 = sbr.rel (%p1400) target = $region40
      $region39: #{res_inception_block_v1.1} parent=31 // pred_region
        %v1403 = vld [vmem:[#allocation2] sm:$0xff]
        %v1404 = vld [vmem:[#allocation2 + $0x8] sm:$0xff]
        %v1405 = vld [vmem:[#allocation2 + $0x10] sm:$0xff]
        %v1406 = vld [vmem:[#allocation2 + $0x18] sm:$0xff]
        %v1407 = vld [vmem:[#allocation2 + $0x20] sm:$0xff]
        %v1408 = vld [vmem:[#allocation2 + $0x28] sm:$0xff]
        %v1409 = vld [vmem:[#allocation2 + $0x30] sm:$0xff]
        %v1410 = vld [vmem:[#allocation2 + $0x38] sm:$0xff]
        %v1411 = vld [vmem:[#allocation2 + $0x40] sm:$0xff]
        %v1412 = vld [vmem:[#allocation2 + $0x48] sm:$0xff]
        %v1413 = vld [vmem:[#allocation2 + $0x50] sm:$0xff]
        %v1414 = vld [vmem:[#allocation2 + $0x58] sm:$0xff]
        %v1415 = vld [vmem:[#allocation2 + $0x60] sm:$0xff]
        %v1416 = vld [vmem:[#allocation2 + $0x68] sm:$0xff]
        %v1417 = vld [vmem:[#allocation2 + $0x70] sm:$0xff]
        %v1418 = vld [vmem:[#allocation2 + $0x78] sm:$0xff]
        %v1419 = vld [vmem:[#allocation2 + $0x80] sm:$0xff]
        %v1420 = vld [vmem:[#allocation2 + $0x88] sm:$0xff]
        %v1421 = vld [vmem:[#allocation2 + $0x90] sm:$0xff]
        %v1422 = vld [vmem:[#allocation2 + $0x98] sm:$0xff]
        %v1423 = vld [vmem:[#allocation2 + $0xa0] sm:$0xff]
        %v1424 = vld [vmem:[#allocation2 + $0xa8] sm:$0xff]
        %v1425 = vld [vmem:[#allocation2 + $0xb0] sm:$0xff]
        %v1426 = vld [vmem:[#allocation2 + $0xb8] sm:$0xff]
        %v1427 = vld [vmem:[#allocation2 + $0xc0] sm:$0xff]
        %v1428 = vld [vmem:[#allocation2 + $0xc8] sm:$0xff]
        %v1429 = vld [vmem:[#allocation2 + $0xd0] sm:$0xff]
        %v1430 = vld [vmem:[#allocation2 + $0xd8] sm:$0xff]
        %v1431 = vld [vmem:[#allocation2 + $0xe0] sm:$0xff]
        %v1432 = vld [vmem:[#allocation2 + $0xe8] sm:$0xff]
        %v1433 = vld [vmem:[#allocation2 + $0xf0] sm:$0xff]
        %v1434 = vld [vmem:[#allocation2 + $0xf8] sm:$0xff]
        %v1435 = vpack.c.bf16 %v1404, %v1403
        %v1436 = vpack.c.bf16 %v1406, %v1405
        %v1437 = vpack.c.bf16 %v1408, %v1407
        %v1438 = vpack.c.bf16 %v1410, %v1409
        %v1439 = vpack.c.bf16 %v1412, %v1411
        %v1440 = vpack.c.bf16 %v1414, %v1413
        %v1441 = vpack.c.bf16 %v1416, %v1415
        %v1442 = vpack.c.bf16 %v1418, %v1417
        %v1443 = vpack.c.bf16 %v1420, %v1419
        %v1444 = vpack.c.bf16 %v1422, %v1421
        %v1445 = vpack.c.bf16 %v1424, %v1423
        %v1446 = vpack.c.bf16 %v1426, %v1425
        %v1447 = vpack.c.bf16 %v1428, %v1427
        %v1448 = vpack.c.bf16 %v1430, %v1429
        %v1449 = vpack.c.bf16 %v1432, %v1431
        %v1450 = vpack.c.bf16 %v1434, %v1433
        %v1467 = vunpack.c.l.b16 %v1435
        %v1468 = vunpack.c.h.b16 %v1435
        %v1469 = vunpack.c.l.b16 %v1436
        %v1470 = vunpack.c.h.b16 %v1436
        %v1471 = vunpack.c.l.b16 %v1437
        %v1472 = vunpack.c.h.b16 %v1437
        %v1473 = vunpack.c.l.b16 %v1438
        %v1474 = vunpack.c.h.b16 %v1438
        %v1475 = vunpack.c.l.b16 %v1439
        %v1476 = vunpack.c.h.b16 %v1439
        %v1477 = vunpack.c.l.b16 %v1440
        %v1478 = vunpack.c.h.b16 %v1440
        %v1479 = vunpack.c.l.b16 %v1441
        %v1480 = vunpack.c.h.b16 %v1441
        %v1481 = vunpack.c.l.b16 %v1442
        %v1482 = vunpack.c.h.b16 %v1442
        %v1483 = vunpack.c.l.b16 %v1443
        %v1484 = vunpack.c.h.b16 %v1443
        %v1485 = vunpack.c.l.b16 %v1444
        %v1486 = vunpack.c.h.b16 %v1444
        %v1487 = vunpack.c.l.b16 %v1445
        %v1488 = vunpack.c.h.b16 %v1445
        %v1489 = vunpack.c.l.b16 %v1446
        %v1490 = vunpack.c.h.b16 %v1446
        %v1491 = vunpack.c.l.b16 %v1447
        %v1492 = vunpack.c.h.b16 %v1447
        %v1493 = vunpack.c.l.b16 %v1448
        %v1494 = vunpack.c.h.b16 %v1448
        %v1495 = vunpack.c.l.b16 %v1449
        %v1496 = vunpack.c.h.b16 %v1449
        %v1497 = vunpack.c.l.b16 %v1450
        %v1498 = vunpack.c.h.b16 %v1450
        %v1499 = vpack.c.b16 %v1467, %v1467
        %v1500 = vpack.c.b16 %v1468, %v1468
        %v1501 = vpack.c.b16 %v1469, %v1469
        %v1502 = vpack.c.b16 %v1470, %v1470
        %v1503 = vpack.c.b16 %v1471, %v1471
        %v1504 = vpack.c.b16 %v1472, %v1472
        %v1505 = vpack.c.b16 %v1473, %v1473
        %v1506 = vpack.c.b16 %v1474, %v1474
        %v1507 = vpack.c.b16 %v1475, %v1475
        %v1508 = vpack.c.b16 %v1476, %v1476
        %v1509 = vpack.c.b16 %v1477, %v1477
        %v1510 = vpack.c.b16 %v1478, %v1478
        %v1511 = vpack.c.b16 %v1479, %v1479
        %v1512 = vpack.c.b16 %v1480, %v1480
        %v1513 = vpack.c.b16 %v1481, %v1481
        %v1514 = vpack.c.b16 %v1482, %v1482
        %v1515 = vpack.c.b16 %v1483, %v1483
        %v1516 = vpack.c.b16 %v1484, %v1484
        %v1517 = vpack.c.b16 %v1485, %v1485
        %v1518 = vpack.c.b16 %v1486, %v1486
        %v1519 = vpack.c.b16 %v1487, %v1487
        %v1520 = vpack.c.b16 %v1488, %v1488
        %v1521 = vpack.c.b16 %v1489, %v1489
        %v1522 = vpack.c.b16 %v1490, %v1490
        %v1523 = vpack.c.b16 %v1491, %v1491
        %v1524 = vpack.c.b16 %v1492, %v1492
        %v1525 = vpack.c.b16 %v1493, %v1493
        %v1526 = vpack.c.b16 %v1494, %v1494
        %v1527 = vpack.c.b16 %v1495, %v1495
        %v1528 = vpack.c.b16 %v1496, %v1496
        %v1529 = vpack.c.b16 %v1497, %v1497
        %v1530 = vpack.c.b16 %v1498, %v1498
        %1563 = vst [vmem:[%s296] sm:$0xf] %v1499
        %1564 = vst [vmem:[%s296 + $0x4] sm:$0xf] %v1500
        %1565 = vst [vmem:[%s296 + $0x8] sm:$0xf] %v1501
        %1566 = vst [vmem:[%s296 + $0xc] sm:$0xf] %v1502
        %1567 = vst [vmem:[%s296 + $0x10] sm:$0xf] %v1503
        %1568 = vst [vmem:[%s296 + $0x14] sm:$0xf] %v1504
        %1569 = vst [vmem:[%s296 + $0x18] sm:$0xf] %v1505
        %1570 = vst [vmem:[%s296 + $0x1c] sm:$0xf] %v1506
        %1571 = vst [vmem:[%s296 + $0x20] sm:$0xf] %v1507
        %1572 = vst [vmem:[%s296 + $0x24] sm:$0xf] %v1508
        %1573 = vst [vmem:[%s296 + $0x28] sm:$0xf] %v1509
        %1574 = vst [vmem:[%s296 + $0x2c] sm:$0xf] %v1510
        %1575 = vst [vmem:[%s296 + $0x30] sm:$0xf] %v1511
        %1576 = vst [vmem:[%s296 + $0x34] sm:$0xf] %v1512
        %1577 = vst [vmem:[%s296 + $0x38] sm:$0xf] %v1513
        %1578 = vst [vmem:[%s296 + $0x3c] sm:$0xf] %v1514
        %1579 = vst [vmem:[%s296 + $0x40] sm:$0xf] %v1515
        %1580 = vst [vmem:[%s296 + $0x44] sm:$0xf] %v1516
        %1581 = vst [vmem:[%s296 + $0x48] sm:$0xf] %v1517
        %1582 = vst [vmem:[%s296 + $0x4c] sm:$0xf] %v1518
        %1583 = vst [vmem:[%s296 + $0x50] sm:$0xf] %v1519
        %1584 = vst [vmem:[%s296 + $0x54] sm:$0xf] %v1520
        %1585 = vst [vmem:[%s296 + $0x58] sm:$0xf] %v1521
        %1586 = vst [vmem:[%s296 + $0x5c] sm:$0xf] %v1522
        %1587 = vst [vmem:[%s296 + $0x60] sm:$0xf] %v1523
        %1588 = vst [vmem:[%s296 + $0x64] sm:$0xf] %v1524
        %1589 = vst [vmem:[%s296 + $0x68] sm:$0xf] %v1525
        %1590 = vst [vmem:[%s296 + $0x6c] sm:$0xf] %v1526
        %1591 = vst [vmem:[%s296 + $0x70] sm:$0xf] %v1527
        %1592 = vst [vmem:[%s296 + $0x74] sm:$0xf] %v1528
        %1593 = vst [vmem:[%s296 + $0x78] sm:$0xf] %v1529
        %1594 = vst [vmem:[%s296 + $0x7c] sm:$0xf] %v1530
      $region40: #{res_inception_block_v1.1} parent=31 // pred_fallthru
        _
      %s1595 = smul.u32 32, %s22
      %p1596 = scmp.lt.s32.totalorder %s21, 1
      %s1597 = scalar_select %p1596, %s21, 1
      %p1598 = scmp.lt.s32.totalorder %s1595, 31
      %s1599 = scalar_select %p1598, %s1595, 31
      %p1600 = scmp.lt.s32.totalorder %s20, 0
      %s1601 = scalar_select %p1600, %s20, 0
      %s1602 = sadd.s32 %s1601, %s1599
      %s1603 = smul.addr %s1597, 32
      %s1604 = sadd.s32 %s1602, %s1603
      %s1605 = smul.addr %s1604, 4
      %s1606 = scalar_lea.vmem %s3, %s1605
      // Predicated region
      $region41: #{res_inception_block_v1.1} parent=31 // pred_check
        %p1607 = pneg %p146
      $region42: #{res_inception_block_v1.1} parent=31 // pred_check_branch
        %1609 = sbr.rel (%p1607) target = $region44
      $region43: #{res_inception_block_v1.1} parent=31 // pred_region
        %s1610 = smul.u32 32, %s22
      $region44: #{res_inception_block_v1.1} parent=31 // pred_fallthru
        _
    $region32: #{res_inception_block_v1.1} parent=5 // pred_fallthru
      _
    %p1611 = scmp.le.s32.totalorder 2, %s9
    // Predicated region
    $region45: #{res_inception_block_v1.1} parent=5 // pred_check
      %p1612 = pneg %p1611
    $region46: #{res_inception_block_v1.1} parent=5 // pred_check_branch
      %1614 = sbr.rel (%p1612) target = $region48
    $region47: #{res_inception_block_v1.1} parent=5 // pred_region
      %s1615 = ssub.s32 %s9, 2
      // Predicated region
      $region49: #{res_inception_block_v1.1} parent=47 // pred_check
        %p1616 = pneg %p152
      $region50: #{res_inception_block_v1.1} parent=47 // pred_check_branch
        %1618 = sbr.rel (%p1616) target = $region52
      $region51: #{res_inception_block_v1.1} parent=47 // pred_region
        %s1619 = smul.u32 32, %s26
        %p1620 = scmp.lt.s32.totalorder %s25, 1
        %s1621 = scalar_select %p1620, %s25, 1
        %p1622 = scmp.lt.s32.totalorder %s1619, 31
        %s1623 = scalar_select %p1622, %s1619, 31
        %p1624 = scmp.lt.s32.totalorder %s24, 0
        %s1625 = scalar_select %p1624, %s24, 0
        %s1626 = sadd.s32 %s1625, %s1623
        %s1627 = smul.addr %s1621, 32
        %s1628 = sadd.s32 %s1626, %s1627
        %s1629 = smul.addr %s1628, 4
        %s1630 = scalar_lea.vmem %s3, %s1629
      $region52: #{res_inception_block_v1.1} parent=47 // pred_fallthru
        _
    $region48: #{res_inception_block_v1.1} parent=5 // pred_fallthru
      _
  $region6: #{res_inception_block_v1.1} parent=0 // loop_footer
    %s13 = sadd.s32 1, %s9
  $region7: #{res_inception_block_v1.1} parent=0 // loop_footer_branch
    %8 = sbr.rel target = $region3
  $region8: #{res_inception_block_v1.1} parent=0 // loop_exit
    _

</llo_original>
